<compile_context>
chip_gen: v5e
topology: v5e:2x2
jax: 0.10.0
libtpu: 0.0.40
codegen_flags: <defaults>
</compile_context>

<pallas_src>
import functools
import math

import jax
import jax.numpy as jnp
from jax import lax
from jax.experimental import pallas as pl
from jax.experimental.pallas import tpu as pltpu


# ----------------------------------------------------------------------------
# Tiling helpers
# ----------------------------------------------------------------------------
def _choose_tile(hw, per_lane_f32, cap=None):
    """Pick a spatial (lane) tile size.

    Returns (t_hw, hw_pad, n_tiles).  Uses a single full-extent block when the
    whole spatial axis fits; otherwise a multiple-of-128 tile sized so the
    double-buffered VMEM footprint stays a few MiB (safe on v5e/v6e/v7x).
    """
    budget_lanes = (8 * 1024 * 1024) // (4 * max(per_lane_f32, 1))
    t = max(128, (budget_lanes // 128) * 128)
    t = min(t, 2048)
    if cap is not None:
        t = min(t, max(128, (cap // 128) * 128))
    if hw <= t:
        return hw, hw, 1
    hw_pad = ((hw + t - 1) // t) * t
    return t, hw_pad, hw_pad // t


def _pad_lanes(a, hw_pad):
    hw = a.shape[-1]
    if hw_pad == hw:
        return a
    pad = [(0, 0)] * (a.ndim - 1) + [(0, hw_pad - hw)]
    return jnp.pad(a, pad)


# ----------------------------------------------------------------------------
# Kernel 1: lifting branch  (base +/- tanh(conv4x4(reflect_pad(x_src))))
# ----------------------------------------------------------------------------
def _lifting_branch_kernel(cols_ref, base_ref, w_ref, b_ref, o_ref, *, sign):
    # cols_ref: (1, KKC, t)   im2col patches of the conv input
    # base_ref: (1, C,   t)   half that the conv output is added to / subtracted from
    # w_ref   : (C, KKC)      conv weight as a matmul
    # b_ref   : (C, 1)        conv bias
    # o_ref   : (1, C, t)
    conv = jnp.dot(w_ref[...], cols_ref[0].astype(jnp.float32),
                   preferred_element_type=jnp.float32,
                   precision=lax.Precision.HIGHEST)          # (C, t)
    act = jnp.tanh(conv + b_ref[...])
    base = base_ref[0].astype(jnp.float32)
    res = base + act if sign > 0 else base - act
    o_ref[0] = res.astype(o_ref.dtype)


def lifting_branch(x_src, base, w, b, *, sign, k_size=4, t_hw_cap=None):
    """Computes base + sign * tanh(Conv2d(ReflectionPad2d(x_src))).

    x_src, base: (B, C, H, W);  w: (C, C, k, k);  b: (C,).
    """
    B, C, H, W = x_src.shape
    HW = H * W
    p0 = k_size // 2
    p1 = k_size - 1 - k_size // 2
    xpad = jnp.pad(x_src, ((0, 0), (0, 0), (p0, p1), (p0, p1)), mode="reflect")

    # im2col (layout prep in the wrapper): (B, k*k*C, H*W), (ki,kj)-major.
    patches = [xpad[:, :, ki:ki + H, kj:kj + W].reshape(B, C, HW)
               for ki in range(k_size) for kj in range(k_size)]
    cols = jnp.concatenate(patches, axis=1)
    kkc = k_size * k_size * C
    w_mat = jnp.transpose(w, (0, 2, 3, 1)).reshape(C, kkc)
    b_col = b.reshape(C, 1).astype(jnp.float32)
    base_flat = base.reshape(B, C, HW)

    t_hw, hw_pad, n_t = _choose_tile(HW, per_lane_f32=kkc + 2 * C, cap=t_hw_cap)
    cols = _pad_lanes(cols, hw_pad)
    base_flat = _pad_lanes(base_flat, hw_pad)

    kernel = functools.partial(_lifting_branch_kernel, sign=sign)
    out = pl.pallas_call(
        kernel,
        out_shape=jax.ShapeDtypeStruct((B, C, hw_pad), x_src.dtype),
        grid_spec=pltpu.PrefetchScalarGridSpec(
            num_scalar_prefetch=0,
            grid=(B, n_t),
            in_specs=[
                pl.BlockSpec((1, kkc, t_hw), lambda bb, tt: (bb, 0, tt)),
                pl.BlockSpec((1, C, t_hw), lambda bb, tt: (bb, 0, tt)),
                pl.BlockSpec((C, kkc), lambda bb, tt: (0, 0)),
                pl.BlockSpec((C, 1), lambda bb, tt: (0, 0)),
            ],
            out_specs=pl.BlockSpec((1, C, t_hw), lambda bb, tt: (bb, 0, tt)),
        ),
        compiler_params=pltpu.CompilerParams(
            dimension_semantics=("parallel", "parallel")),
        cost_estimate=pl.CostEstimate(
            flops=int(2 * B * C * kkc * HW),
            transcendentals=int(B * C * HW),
            bytes_accessed=int(4 * (B * kkc * HW + 3 * B * C * HW + C * kkc)),
        ),
    )(cols, base_flat, w_mat, b_col)
    return out[:, :, :HW].reshape(B, C, H, W)


# ----------------------------------------------------------------------------
# Kernel 2: ChannelAttention ('network' importance mode)
# ----------------------------------------------------------------------------
def _channel_attention_kernel(x_ref, w1_ref, w2_ref, o_ref, sum_sc, max_sc,
                              *, hw_true, t_hw, needs_mask):
    # x_ref : (1, C, t_hw) one spatial tile; w1: (Cr, C); w2: (C, Cr); o: (1, C, 1)
    k = pl.program_id(1)
    nk = pl.num_programs(1)

    @pl.when(k == 0)
    def _init():
        sum_sc[...] = jnp.zeros(sum_sc.shape, sum_sc.dtype)
        max_sc[...] = jnp.full(max_sc.shape, -jnp.inf, dtype=max_sc.dtype)

    x = x_ref[0].astype(jnp.float32)                          # (C, t_hw)
    if needs_mask:
        col = k * t_hw + lax.broadcasted_iota(jnp.int32, x.shape, 1)
        valid = col < hw_true
        x_sum = jnp.where(valid, x, 0.0)
        x_max = jnp.where(valid, x, -jnp.inf)
    else:
        x_sum = x
        x_max = x

    sum_sc[...] += jnp.sum(x_sum, axis=-1, keepdims=True)
    max_sc[...] = jnp.maximum(max_sc[...],
                              jnp.max(x_max, axis=-1, keepdims=True))

    @pl.when(k == nk - 1)
    def _finalize():
        avg = sum_sc[...] * jnp.float32(1.0 / hw_true)            # (C, 1)
        pooled = jnp.concatenate([avg, max_sc[...]], axis=1)      # (C, 2)
        h = jnp.dot(w1_ref[...], pooled,
                    preferred_element_type=jnp.float32,
                    precision=lax.Precision.HIGHEST)              # (Cr, 2)
        h = jnp.maximum(h, 0.0)                                   # ReLU
        out2 = jnp.dot(w2_ref[...], h,
                       preferred_element_type=jnp.float32,
                       precision=lax.Precision.HIGHEST)           # (C, 2)
        o = jnp.tanh(out2[:, 0:1] + out2[:, 1:2])                 # (C, 1)
        o_ref[0] = o.astype(o_ref.dtype)


def channel_attention(x, w1, w2, *, t_hw_cap=None):
    """ChannelAttention forward.  x: (B,C,H,W); w1: (Cr,C); w2: (C,Cr) -> (B,C,1,1)."""
    B, C, H, W = x.shape
    Cr = w1.shape[0]
    HW = H * W
    x_flat = x.reshape(B, C, HW)
    t_hw, hw_pad, n_t = _choose_tile(HW, per_lane_f32=C, cap=t_hw_cap)
    x_flat = _pad_lanes(x_flat, hw_pad)
    needs_mask = hw_pad != HW

    kernel = functools.partial(_channel_attention_kernel,
                               hw_true=HW, t_hw=t_hw, needs_mask=needs_mask)
    out = pl.pallas_call(
        kernel,
        out_shape=jax.ShapeDtypeStruct((B, C, 1), x.dtype),
        grid_spec=pltpu.PrefetchScalarGridSpec(
            num_scalar_prefetch=0,
            grid=(B, n_t),
            in_specs=[
                pl.BlockSpec((1, C, t_hw), lambda bb, kk: (bb, 0, kk)),
                pl.BlockSpec((Cr, C), lambda bb, kk: (0, 0)),
                pl.BlockSpec((C, Cr), lambda bb, kk: (0, 0)),
            ],
            out_specs=pl.BlockSpec((1, C, 1), lambda bb, kk: (bb, 0, 0)),
            scratch_shapes=[
                pltpu.VMEM((C, 1), jnp.float32),   # running sum
                pltpu.VMEM((C, 1), jnp.float32),   # running max
            ],
        ),
        compiler_params=pltpu.CompilerParams(
            dimension_semantics=("parallel", "arbitrary")),
        cost_estimate=pl.CostEstimate(
            flops=int(B * (2 * C * HW + 8 * C * Cr)),
            transcendentals=int(B * C),
            bytes_accessed=int(4 * (B * C * HW + 2 * C * Cr + B * C)),
        ),
    )(x_flat, w1, w2)
    return out.reshape(B, C, 1, 1)


# ----------------------------------------------------------------------------
# Kernel 3: importance scaling + channel interleave
# ----------------------------------------------------------------------------
def _scale_interleave_kernel(c_ref, d_ref, ac_ref, ad_ref, o_ref):
    # c_ref, d_ref: (1, C, t); ac_ref, ad_ref: (1, C, 1); o_ref: (1, 2, C, t)
    o_ref[0, 0] = (c_ref[0].astype(jnp.float32) * ac_ref[0]).astype(o_ref.dtype)
    o_ref[0, 1] = (d_ref[0].astype(jnp.float32) * ad_ref[0]).astype(o_ref.dtype)


def scale_interleave(c, d, att_c, att_d, *, t_hw_cap=None):
    """torch.stack((c*att_c, d*att_d), dim=2).reshape(B, 2C, H, W)."""
    B, C, H, W = c.shape
    HW = H * W
    c_flat = c.reshape(B, C, HW)
    d_flat = d.reshape(B, C, HW)
    ac = att_c.reshape(B, C, 1).astype(jnp.float32)
    ad = att_d.reshape(B, C, 1).astype(jnp.float32)

    t_hw, hw_pad, n_t = _choose_tile(HW, per_lane_f32=4 * C, cap=t_hw_cap)
    c_flat = _pad_lanes(c_flat, hw_pad)
    d_flat = _pad_lanes(d_flat, hw_pad)

    out = pl.pallas_call(
        _scale_interleave_kernel,
        out_shape=jax.ShapeDtypeStruct((B, 2, C, hw_pad), c.dtype),
        grid_spec=pltpu.PrefetchScalarGridSpec(
            num_scalar_prefetch=0,
            grid=(B, n_t),
            in_specs=[
                pl.BlockSpec((1, C, t_hw), lambda bb, tt: (bb, 0, tt)),
                pl.BlockSpec((1, C, t_hw), lambda bb, tt: (bb, 0, tt)),
                pl.BlockSpec((1, C, 1), lambda bb, tt: (bb, 0, 0)),
                pl.BlockSpec((1, C, 1), lambda bb, tt: (bb, 0, 0)),
            ],
            out_specs=pl.BlockSpec((1, 2, C, t_hw), lambda bb, tt: (bb, 0, 0, tt)),
        ),
        compiler_params=pltpu.CompilerParams(
            dimension_semantics=("parallel", "parallel")),
    )(c_flat, d_flat, ac, ad)
    out = out[:, :, :, :HW]                                  # (B, 2, C, HW)
    out = jnp.transpose(out, (0, 2, 1, 3))                   # (B, C, 2, HW)
    return out.reshape(B, 2 * C, H, W)


# ----------------------------------------------------------------------------
# Module forward
# ----------------------------------------------------------------------------
def lifting_scheme_2d_by_channel(x, params, *, num_heads=1, modified=False,
                                 k_size=4, importance_method="hand",
                                 t_hw_cap=None):
    """Forward of LiftingScheme2D_by_channel (simple_lifting=True).

    x has 2*in_planes channels: the reference module's P/U Conv2d layers take
    in_planes channels, i.e. one split half.
    """
    if num_heads == 1:
        return x  # reference forward returns the input unchanged
    if num_heads != 2:
        # TODO(synk): num_heads == 4 (second lifting level with P1/U1) reuses the
        # same kernels recursively but is not wired up here.
        raise NotImplementedError("num_heads must be 1 or 2")

    x_even, x_odd = x[:, ::2], x[:, 1::2]
    if modified:
        c = lifting_branch(x_odd, x_even, params["wU"], params["bU"], sign=+1,
                           k_size=k_size, t_hw_cap=t_hw_cap)
        d = lifting_branch(c, x_odd, params["wP"], params["bP"], sign=-1,
                           k_size=k_size, t_hw_cap=t_hw_cap)
    else:
        d = lifting_branch(x_even, x_odd, params["wP"], params["bP"], sign=-1,
                           k_size=k_size, t_hw_cap=t_hw_cap)
        c = lifting_branch(d, x_even, params["wU"], params["bU"], sign=+1,
                           k_size=k_size, t_hw_cap=t_hw_cap)

    B, C, H, W = c.shape
    if importance_method == "hand":
        att_c = jnp.full((B, C, 1, 1), math.tanh(0.7), dtype=jnp.float32)
        att_d = jnp.full((B, C, 1, 1), math.tanh(0.3), dtype=jnp.float32)
    elif importance_method == "network":
        both = jnp.concatenate([c, d], axis=0)           # one cam1 call for c and d
        att = channel_attention(both, params["cam_w1"], params["cam_w2"],
                                t_hw_cap=t_hw_cap)
        att_c, att_d = att[:B], att[B:]
    else:
        # TODO(synk): 'similarity' importance (cal_cor2 correlation matrices) is
        # not translated to a Pallas kernel.
        raise NotImplementedError("importance_method must be 'hand' or 'network'")

    return scale_interleave(c, d, att_c, att_d, t_hw_cap=t_hw_cap)


# ----------------------------------------------------------------------------
# Parameter init (mirrors torch defaults closely enough for testing)
# ----------------------------------------------------------------------------
def init_params(key, in_planes, *, k_size=4, cam_ratio=8):
    kpw, kpb, kuw, kub, kc1, kc2 = jax.random.split(key, 6)
    fan_in = in_planes * k_size * k_size
    bound = 1.0 / math.sqrt(fan_in)

    def conv_init(kw, kb):
        w = jax.random.uniform(kw, (in_planes, in_planes, k_size, k_size),
                               minval=-bound, maxval=bound, dtype=jnp.float32)
        b = jax.random.uniform(kb, (in_planes,), minval=-bound, maxval=bound,
                               dtype=jnp.float32)
        return w, b

    wP, bP = conv_init(kpw, kpb)
    wU, bU = conv_init(kuw, kub)
    hidden = max(in_planes // cam_ratio, 1)
    # ChannelAttention._init_weights: normal(0, sqrt(2/fan_out)), no bias.
    cam_w1 = math.sqrt(2.0 / hidden) * jax.random.normal(
        kc1, (hidden, in_planes), dtype=jnp.float32)
    cam_w2 = math.sqrt(2.0 / in_planes) * jax.random.normal(
        kc2, (in_planes, hidden), dtype=jnp.float32)
    return dict(wP=wP, bP=bP, wU=wU, bU=bU, cam_w1=cam_w1, cam_w2=cam_w2)


# ----------------------------------------------------------------------------
# Pure-JAX reference of the PyTorch forward
# ----------------------------------------------------------------------------
def _conv_tanh_ref(x, w, b, k_size):
    p0 = k_size // 2
    p1 = k_size - 1 - k_size // 2
    xp = jnp.pad(x, ((0, 0), (0, 0), (p0, p1), (p0, p1)), mode="reflect")
    y = lax.conv_general_dilated(xp, w, (1, 1), "VALID",
                                 dimension_numbers=("NCHW", "OIHW", "NCHW"),
                                 precision=lax.Precision.HIGHEST)
    return jnp.tanh(y + b[None, :, None, None])


def _channel_attention_ref(x, w1, w2):
    avg = jnp.mean(x, axis=(2, 3))
    mx = jnp.max(x, axis=(2, 3))

    def branch(p):
        h = jnp.maximum(jnp.matmul(p, w1.T, precision=lax.Precision.HIGHEST), 0.0)
        return jnp.matmul(h, w2.T, precision=lax.Precision.HIGHEST)

    return jnp.tanh(branch(avg) + branch(mx))[:, :, None, None]


def _reference_forward(x, params, *, num_heads, modified, importance_method,
                       k_size=4):
    if num_heads == 1:
        return x
    x_even, x_odd = x[:, ::2], x[:, 1::2]
    if modified:
        c = x_even + _conv_tanh_ref(x_odd, params["wU"], params["bU"], k_size)
        d = x_odd - _conv_tanh_ref(c, params["wP"], params["bP"], k_size)
    else:
        d = x_odd - _conv_tanh_ref(x_even, params["wP"], params["bP"], k_size)
        c = x_even + _conv_tanh_ref(d, params["wU"], params["bU"], k_size)
    B, C, H, W = c.shape
    if importance_method == "hand":
        att_c = jnp.full((B, C, 1, 1), math.tanh(0.7), dtype=jnp.float32)
        att_d = jnp.full((B, C, 1, 1), math.tanh(0.3), dtype=jnp.float32)
    else:
        att_c = _channel_attention_ref(c, params["cam_w1"], params["cam_w2"])
        att_d = _channel_attention_ref(d, params["cam_w1"], params["cam_w2"])
    return jnp.stack([c * att_c, d * att_d], axis=2).reshape(B, 2 * C, H, W)


# ----------------------------------------------------------------------------
# Self-test
# ----------------------------------------------------------------------------
if __name__ == "__main__":
    key = jax.random.PRNGKey(0)
    kx, kp, kx2 = jax.random.split(key, 3)

    in_planes = 16                 # per lifting half; module input has 2*in_planes channels
    B, H, W = 2, 16, 16
    x = jax.random.normal(kx, (B, 2 * in_planes, H, W), dtype=jnp.float32)
    params = init_params(kp, in_planes)

    # 1) Default LiftingScheme2D_by_channel config (num_heads=1): identity.
    out_id = jax.block_until_ready(
        lifting_scheme_2d_by_channel(x, params, num_heads=1))
    assert out_id.shape == x.shape and bool(jnp.allclose(out_id, x))

    # 2) num_heads=2, 'hand' importance (the module's default importance path).
    out_hand = jax.block_until_ready(
        lifting_scheme_2d_by_channel(x, params, num_heads=2,
                                     importance_method="hand"))
    ref_hand = _reference_forward(x, params, num_heads=2, modified=False,
                                  importance_method="hand")
    assert out_hand.shape == (B, 2 * in_planes, H, W)
    assert bool(jnp.allclose(out_hand, ref_hand, atol=1e-3, rtol=1e-3)), \
        "mismatch (num_heads=2, hand)"

    # 3) num_heads=2, 'network' importance, odd spatial size with a forced
    #    small tile cap to exercise the padded/tiled + masked-reduction paths.
    H2 = W2 = 17
    x2 = jax.random.normal(kx2, (B, 2 * in_planes, H2, W2), dtype=jnp.float32)
    out_net = jax.block_until_ready(
        lifting_scheme_2d_by_channel(x2, params, num_heads=2,
                                     importance_method="network",
                                     t_hw_cap=128))
    ref_net = _reference_forward(x2, params, num_heads=2, modified=False,
                                 importance_method="network")
    assert out_net.shape == (B, 2 * in_planes, H2, W2)
    assert bool(jnp.allclose(out_net, ref_net, atol=1e-3, rtol=1e-3)), \
        "mismatch (num_heads=2, network, tiled)"

    print("KERNEL_OK")
</pallas_src>

<mosaic_0001>
module attributes {stable_mosaic.version = 11 : i64} {
  func.func @_lifting_branch_kernel(%arg0: i32, %arg1: i32, %arg2: memref<1x256x256xf32, #tpu.memory_space<vmem>>, %arg3: memref<1x16x256xf32, #tpu.memory_space<vmem>>, %arg4: memref<16x256xf32, #tpu.memory_space<vmem>>, %arg5: memref<16x1xf32, #tpu.memory_space<vmem>>, %arg6: memref<1x16x256xf32, #tpu.memory_space<vmem>>) attributes {dimension_semantics = [#tpu.dimension_semantics<parallel>, #tpu.dimension_semantics<parallel>], iteration_bounds = array<i64: 2, 1>, scalar_prefetch = 0 : i64, scratch_operands = 0 : i64, tpu.core_type = #tpu.core_type<tc>, window_params = [{transform_indices = @transform_0, window_bounds = array<i64: 1, 256, 256>}, {transform_indices = @transform_1, window_bounds = array<i64: 1, 16, 256>}, {pipeline_mode = #tpu.pipeline_mode<synchronous>, transform_indices = @transform_2, window_bounds = array<i64: 16, 256>}, {pipeline_mode = #tpu.pipeline_mode<synchronous>, transform_indices = @transform_3, window_bounds = array<i64: 16, 1>}, {transform_indices = @transform_4, window_bounds = array<i64: 1, 16, 256>}]} {
    %c0 = arith.constant 0 : index
    %c0_0 = arith.constant 0 : index
    %0 = vector.load %arg4[%c0, %c0_0] : memref<16x256xf32, #tpu.memory_space<vmem>>, vector<16x256xf32>
    %c0_1 = arith.constant 0 : index
    %c0_2 = arith.constant 0 : index
    %c0_3 = arith.constant 0 : index
    %1 = vector.load %arg2[%c0_1, %c0_2, %c0_3] : memref<1x256x256xf32, #tpu.memory_space<vmem>>, vector<1x256x256xf32>
    %2 = vector.shape_cast %1 : vector<1x256x256xf32> to vector<256x256xf32>
    %cst = arith.constant dense<0.000000e+00> : vector<16x256xf32>
    %3 = tpu.matmul %0, %2, %cst {dimension_numbers = #tpu.dot_dimension_numbers<[1], [0], [0], [1], [0, 0, 1, 1], [], []>, precision = #tpu.contract_precision<fp32>} : vector<16x256xf32>, vector<256x256xf32>, vector<16x256xf32> -> vector<16x256xf32>
    %c0_4 = arith.constant 0 : index
    %c0_5 = arith.constant 0 : index
    %4 = vector.load %arg5[%c0_4, %c0_5] : memref<16x1xf32, #tpu.memory_space<vmem>>, vector<16x1xf32>
    %5 = vector.broadcast %4 : vector<16x1xf32> to vector<16x256xf32>
    %6 = arith.addf %3, %5 : vector<16x256xf32>
    %7 = math.tanh %6 : vector<16x256xf32>
    %c0_6 = arith.constant 0 : index
    %c0_7 = arith.constant 0 : index
    %c0_8 = arith.constant 0 : index
    %8 = vector.load %arg3[%c0_6, %c0_7, %c0_8] : memref<1x16x256xf32, #tpu.memory_space<vmem>>, vector<1x16x256xf32>
    %9 = vector.shape_cast %8 : vector<1x16x256xf32> to vector<16x256xf32>
    %10 = arith.subf %9, %7 : vector<16x256xf32>
    %c0_9 = arith.constant 0 : index
    %c0_10 = arith.constant 0 : index
    %c0_11 = arith.constant 0 : index
    %11 = vector.load %arg6[%c0_9, %c0_10, %c0_11] : memref<1x16x256xf32, #tpu.memory_space<vmem>>, vector<1x16x256xf32>
    %12 = vector.shape_cast %11 : vector<1x16x256xf32> to vector<16x256xf32>
    %13 = vector.shape_cast %10 : vector<16x256xf32> to vector<1x16x256xf32>
    tpu.vector_store %arg6[%c0_9, %c0_10, %c0_11], %13 {strides = array<i32>} : memref<1x16x256xf32, #tpu.memory_space<vmem>>, vector<1x16x256xf32>,
    return
  }
  func.func @transform_0(%arg0: i32, %arg1: i32) -> (i32, i32, i32) {
    %c0_i32 = arith.constant 0 : i32
    %c0_i32_0 = arith.constant 0 : i32
    return %arg0, %c0_i32, %arg1 : i32, i32, i32
  }
  func.func @transform_1(%arg0: i32, %arg1: i32) -> (i32, i32, i32) {
    %c0_i32 = arith.constant 0 : i32
    %c0_i32_0 = arith.constant 0 : i32
    return %arg0, %c0_i32, %arg1 : i32, i32, i32
  }
  func.func @transform_2(%arg0: i32, %arg1: i32) -> (i32, i32) {
    %c0_i32 = arith.constant 0 : i32
    %c0_i32_0 = arith.constant 0 : i32
    %c0_i32_1 = arith.constant 0 : i32
    return %c0_i32, %c0_i32_0 : i32, i32
  }
  func.func @transform_3(%arg0: i32, %arg1: i32) -> (i32, i32) {
    %c0_i32 = arith.constant 0 : i32
    %c0_i32_0 = arith.constant 0 : i32
    %c0_i32_1 = arith.constant 0 : i32
    return %c0_i32, %c0_i32_0 : i32, i32
  }
  func.func @transform_4(%arg0: i32, %arg1: i32) -> (i32, i32, i32) {
    %c0_i32 = arith.constant 0 : i32
    %c0_i32_0 = arith.constant 0 : i32
    return %arg0, %c0_i32, %arg1 : i32, i32, i32
  }
}

</mosaic_0001>

<llo_original>
// kernel: tpu_custom_call.1
$region0: #{tpu_custom_call.1}
  #allocation0 [shape = 'u32[]', space=smem, size = 0x4, offset = 0x4, fixed_abs, tag = 'smem constant byte address 0x4 - core index']
  #allocation1 [shape = 'u32[72,128]{1,0:T(1,128)}', space=vmem, size = 0x9000, scoped, tag = 'internal scratch']
  %s0 = inlined_call_operand.hbm [shape: f32[2,256,256], index: 0, kind: input, shape index: {}]
  %s1 = inlined_call_operand.hbm [shape: f32[2,16,256], index: 1, kind: input, shape index: {}]
  %s2 = inlined_call_operand.hbm [shape: f32[16,256], index: 2, kind: input, shape index: {}]
  %s3 = inlined_call_operand.vmem [shape: f32[16,1], index: 3, kind: input, shape index: {}]
  %s4 = inlined_call_operand.hbm [shape: f32[2,16,256], index: 4, kind: output, shape index: {}]
  %s5 = sld [smem:[#allocation0]]
  $region61: #{tpu_custom_call.1} parent=0
    _
  %s7 = ssub.s32 1, %s5
  %s8 = scalar_select 0, %s7, %s5
  $region1: #{tpu_custom_call.1} parent=0
    #allocation2 [shape = 'u8[524288]{0}', space=vmem, size = 0x80000, scoped, tag = 'input window, operand 0']
    #allocation3 [shape = 's32[2]{0}', space=sflag, size = 0x8, scoped, tag = 'scoped memory for tpu_custom_call.1']
    #allocation4 [shape = 's32[2]{0}', space=sflag, size = 0x8, scoped, tag = 'scoped memory for tpu_custom_call.1']
    #allocation5 [shape = 'u8[32768]{0}', space=vmem, size = 0x8000, scoped, tag = 'input window, operand 1']
    #allocation6 [shape = 's32[2]{0}', space=sflag, size = 0x8, scoped, tag = 'scoped memory for tpu_custom_call.1']
    #allocation7 [shape = 'u8[16384]{0}', space=vmem, size = 0x4000, scoped, tag = 'input window, operand 2, single buffered']
    #allocation8 [shape = 'u8[32768]{0}', space=vmem, size = 0x8000, scoped, tag = 'output window, operand 0']
    %9 = vsyncpa [#allocation3], 0
    %s10 = scalar_lea.sflag [#allocation3], 1
    %11 = vsyncpa %s10, 0
    %12 = vsyncpa [#allocation6], 0
    %s13 = scalar_lea.sflag [#allocation6], 1
    %14 = vsyncpa %s13, 0
    %15 = vsyncpa [#allocation4], 0
    %s16 = scalar_lea.sflag [#allocation4], 1
    %17 = vsyncpa %s16, 0
    loop: start=0, step=1, limit=4
    $region2: #{tpu_custom_call.1} parent=1 // loop_pre_header
      _
    $region3: #{tpu_custom_call.1} parent=1 // loop_header
      %s19 = sphi 0, %s23
      %p20 = scmp.ge.s32.totalorder %s19, 4
      %s26 = sphi 0, %s38
      %s27 = sphi 0, %s34
      %s28 = sphi 0, %s26
      %s29 = sphi 0, %s27
      %s30 = sphi 0, %s28
      %s31 = sphi 0, %s29
      %s43 = sphi 0, %s45
      %s46 = sphi 0, %s43
      %s47 = sphi 0, %s46
      %s63 = sphi 0, %s47
      %s71 = sphi 0, %s73
      %s74 = sphi 0, %s71
      %s75 = sphi 0, %s74
      %s91 = sphi 0, %s75
      %s95 = sphi 0, %s95
      %s97 = sphi 0, %s95
      %s98 = sphi 0, %s97
      %s112 = sphi 0, %s98
      %s116 = sphi 0, %s116
      %s118 = sphi 0, %s116
      %s119 = sphi 0, %s118
      %s133 = sphi 0, %s119
      %s141 = sphi 0, %s143
      %s144 = sphi 0, %s141
      %s145 = sphi 0, %s144
      %s161 = sphi 0, %s145
    $region4: #{tpu_custom_call.1} parent=1 // loop_header_branch
      %22 = sbr.rel (%p20) target = $region8
    $region5: #{tpu_custom_call.1} parent=1 // loop_body
      %s24 = ssub.s32 %s19, 1
      %s25 = ssub.s32 %s19, 2
      %s32 = sadd.s32 1, %s27
      %p33 = scmp.ge.s32.totalorder %s32, 1
      %s34 = scalar_select %p33, 0, %s32
      %s35 = sadd.s32 1, %s26
      %s36 = scalar_select %p33, %s35, %s26
      %p37 = scmp.ge.s32.totalorder %s36, 2
      %s38 = scalar_select %p37, 0, %s36
      %s39 = ssub.s32 %s26, %s38
      %s40 = ssub.s32 %s27, %s34
      %s41 = sor.u32 %s39, %s40
      %p42 = scmp.eq.s32.totalorder %s41, 0
      %s44 = sadd.s32 %s43, 1
      %s45 = scalar_select %p42, %s43, %s44
      %p48 = pneg %p42
      %p49 = scmp.eq.s32.totalorder %s19, 1
      %p50 = por %p48, %p49
      %p51 = scmp.ne.s32.totalorder %s43, %s46
      %p52 = scmp.eq.s32.totalorder %s19, 0
      %p53 = por %p51, %p52
      %p54 = scmp.ne.s32.totalorder %s43, %s46
      %p55 = scmp.eq.s32.totalorder %s24, 1
      %p56 = por %p54, %p55
      %p57 = scmp.ne.s32.totalorder %s46, %s47
      %p58 = scmp.eq.s32.totalorder %s24, 0
      %p59 = por %p57, %p58
      %p60 = scmp.ne.s32.totalorder %s46, %s47
      %p61 = scmp.eq.s32.totalorder %s25, 1
      %p62 = por %p60, %p61
      %p64 = scmp.ne.s32.totalorder %s47, %s63
      %p65 = scmp.eq.s32.totalorder %s25, 0
      %p66 = por %p64, %p65
      %s67 = ssub.s32 %s26, %s38
      %s68 = ssub.s32 %s27, %s34
      %s69 = sor.u32 %s67, %s68
      %p70 = scmp.eq.s32.totalorder %s69, 0
      %s72 = sadd.s32 %s71, 1
      %s73 = scalar_select %p70, %s71, %s72
      %p76 = pneg %p70
      %p77 = scmp.eq.s32.totalorder %s19, 1
      %p78 = por %p76, %p77
      %p79 = scmp.ne.s32.totalorder %s71, %s74
      %p80 = scmp.eq.s32.totalorder %s19, 0
      %p81 = por %p79, %p80
      %p82 = scmp.ne.s32.totalorder %s71, %s74
      %p83 = scmp.eq.s32.totalorder %s24, 1
      %p84 = por %p82, %p83
      %p85 = scmp.ne.s32.totalorder %s74, %s75
      %p86 = scmp.eq.s32.totalorder %s24, 0
      %p87 = por %p85, %p86
      %p88 = scmp.ne.s32.totalorder %s74, %s75
      %p89 = scmp.eq.s32.totalorder %s25, 1
      %p90 = por %p88, %p89
      %p92 = scmp.ne.s32.totalorder %s75, %s91
      %p93 = scmp.eq.s32.totalorder %s25, 0
      %p94 = por %p92, %p93
      %s96 = sadd.s32 %s95, 1
      %p99 = scmp.eq.s32.totalorder %s19, 1
      %p100 = scmp.ne.s32.totalorder %s95, %s97
      %p101 = scmp.eq.s32.totalorder %s19, 0
      %p102 = por %p100, %p101
      %p103 = scmp.ne.s32.totalorder %s95, %s97
      %p104 = scmp.eq.s32.totalorder %s24, 1
      %p105 = por %p103, %p104
      %p106 = scmp.ne.s32.totalorder %s97, %s98
      %p107 = scmp.eq.s32.totalorder %s24, 0
      %p108 = por %p106, %p107
      %p109 = scmp.ne.s32.totalorder %s97, %s98
      %p110 = scmp.eq.s32.totalorder %s25, 1
      %p111 = por %p109, %p110
      %p113 = scmp.ne.s32.totalorder %s98, %s112
      %p114 = scmp.eq.s32.totalorder %s25, 0
      %p115 = por %p113, %p114
      %s117 = sadd.s32 %s116, 1
      %p120 = scmp.eq.s32.totalorder %s19, 1
      %p121 = scmp.ne.s32.totalorder %s116, %s118
      %p122 = scmp.eq.s32.totalorder %s19, 0
      %p123 = por %p121, %p122
      %p124 = scmp.ne.s32.totalorder %s116, %s118
      %p125 = scmp.eq.s32.totalorder %s24, 1
      %p126 = por %p124, %p125
      %p127 = scmp.ne.s32.totalorder %s118, %s119
      %p128 = scmp.eq.s32.totalorder %s24, 0
      %p129 = por %p127, %p128
      %p130 = scmp.ne.s32.totalorder %s118, %s119
      %p131 = scmp.eq.s32.totalorder %s25, 1
      %p132 = por %p130, %p131
      %p134 = scmp.ne.s32.totalorder %s119, %s133
      %p135 = scmp.eq.s32.totalorder %s25, 0
      %p136 = por %p134, %p135
      %s137 = ssub.s32 %s26, %s38
      %s138 = ssub.s32 %s27, %s34
      %s139 = sor.u32 %s137, %s138
      %p140 = scmp.eq.s32.totalorder %s139, 0
      %s142 = sadd.s32 %s141, 1
      %s143 = scalar_select %p140, %s141, %s142
      %p146 = pneg %p140
      %p147 = scmp.eq.s32.totalorder %s19, 1
      %p148 = por %p146, %p147
      %p149 = scmp.ne.s32.totalorder %s141, %s144
      %p150 = scmp.eq.s32.totalorder %s19, 0
      %p151 = por %p149, %p150
      %p152 = scmp.ne.s32.totalorder %s141, %s144
      %p153 = scmp.eq.s32.totalorder %s24, 1
      %p154 = por %p152, %p153
      %p155 = scmp.ne.s32.totalorder %s144, %s145
      %p156 = scmp.eq.s32.totalorder %s24, 0
      %p157 = por %p155, %p156
      %p158 = scmp.ne.s32.totalorder %s144, %s145
      %p159 = scmp.eq.s32.totalorder %s25, 1
      %p160 = por %p158, %p159
      %p162 = scmp.ne.s32.totalorder %s145, %s161
      %p163 = scmp.eq.s32.totalorder %s25, 0
      %p164 = por %p162, %p163
      %p165 = scmp.le.s32.totalorder 1, %s19
      %p166 = scmp.lt.s32.totalorder %s19, 3
      %p167 = pnand %p165, %p166
      %p168 = pneg %p167
      // Predicated region
      $region9: #{tpu_custom_call.1} parent=5 // pred_check
        _
      $region10: #{tpu_custom_call.1} parent=5 // pred_check_branch
        %170 = sbr.rel (%p167) target = $region12
      $region11: #{tpu_custom_call.1} parent=5 // pred_region
        %s171 = ssub.s32 %s19, 1
        // Predicated region
        $region13: #{tpu_custom_call.1} parent=11 // pred_check
          %p172 = pneg %p108
        $region14: #{tpu_custom_call.1} parent=11 // pred_check_branch
          %174 = sbr.rel (%p172) target = $region16
        $region15: #{tpu_custom_call.1} parent=11 // pred_region
          %176 = vsyncadd [#allocation6], 0
          %s177 = sshll.u32 %s2, 4
          %s178 = int_to_ptr.hbm [resolvable:$true] %s177
          %s179 = sshll.u32 [#allocation7], 4
          %s180 = int_to_ptr.vmem [resolvable:$true] %s179
          %185 = dma.hbm_to_vmem [thread:$0]  %s178, 512, %s180, [#allocation6], 256, 256, 16
        $region16: #{tpu_custom_call.1} parent=11 // pred_fallthru
          _
        // Predicated region
        $region17: #{tpu_custom_call.1} parent=11 // pred_check
          %p186 = pneg %p129
        $region18: #{tpu_custom_call.1} parent=11 // pred_check_branch
          %188 = sbr.rel (%p186) target = $region20
        $region19: #{tpu_custom_call.1} parent=11 // pred_region
          _
        $region20: #{tpu_custom_call.1} parent=11 // pred_fallthru
          _
      $region12: #{tpu_custom_call.1} parent=5 // pred_fallthru
        _
      %p189 = scmp.lt.s32.totalorder %s19, 2
      // Predicated region
      $region21: #{tpu_custom_call.1} parent=5 // pred_check
        %p190 = pneg %p189
      $region22: #{tpu_custom_call.1} parent=5 // pred_check_branch
        %192 = sbr.rel (%p190) target = $region24
      $region23: #{tpu_custom_call.1} parent=5 // pred_region
        // Predicated region
        $region25: #{tpu_custom_call.1} parent=23 // pred_check
          %p193 = pneg %p53
        $region26: #{tpu_custom_call.1} parent=23 // pred_check_branch
          %195 = sbr.rel (%p193) target = $region28
        $region27: #{tpu_custom_call.1} parent=23 // pred_region
          %s196 = sand.u32 %s43, 1
          %s197 = scalar_lea.sflag [#allocation3], %s196
          %s198 = sand.u32 %s43, 1
          %s199 = smul.addr %s198, 512
          %s200 = scalar_lea.vmem [#allocation2], %s199
          %s201 = smul.u32 2, %s27
          %203 = vsyncadd %s197, 0
          %s204 = smul.addr %s26, 64
          %s205 = sadd.s32 %s201, %s204
          %s206 = smul.addr %s205, 8
          %s207 = scalar_lea.hbm %s0, %s206
          %s208 = sshll.u32 %s207, 4
          %s209 = int_to_ptr.hbm [resolvable:$true] %s208
          %s210 = sshll.u32 %s200, 4
          %s211 = int_to_ptr.vmem [resolvable:$true] %s210
          %216 = dma.hbm_to_vmem [thread:$0]  %s209, 8192, %s211, %s197, 256, 256, 16
        $region28: #{tpu_custom_call.1} parent=23 // pred_fallthru
          _
        // Predicated region
        $region29: #{tpu_custom_call.1} parent=23 // pred_check
          %p217 = pneg %p81
        $region30: #{tpu_custom_call.1} parent=23 // pred_check_branch
          %219 = sbr.rel (%p217) target = $region32
        $region31: #{tpu_custom_call.1} parent=23 // pred_region
          %s220 = sand.u32 %s19, 1
          %s221 = scalar_lea.sflag [#allocation6], %s220
          %s222 = sand.u32 %s71, 1
          %s223 = smul.addr %s222, 32
          %s224 = scalar_lea.vmem [#allocation5], %s223
          %s225 = smul.u32 2, %s27
          %227 = vsyncadd %s221, 0
          %s228 = smul.addr %s26, 4
          %s229 = sadd.s32 %s225, %s228
          %s230 = smul.addr %s229, 8
          %s231 = scalar_lea.hbm %s1, %s230
          %s232 = sshll.u32 %s231, 4
          %s233 = int_to_ptr.hbm [resolvable:$true] %s232
          %s234 = sshll.u32 %s224, 4
          %s235 = int_to_ptr.vmem [resolvable:$true] %s234
          %240 = dma.hbm_to_vmem [thread:$0]  %s233, 512, %s235, %s221, 256, 256, 16
        $region32: #{tpu_custom_call.1} parent=23 // pred_fallthru
          _
      $region24: #{tpu_custom_call.1} parent=5 // pred_fallthru
        _
      %p241 = scmp.le.s32.totalorder 1, %s19
      %p242 = scmp.lt.s32.totalorder %s19, 3
      %p243 = pnand %p241, %p242
      %p244 = pneg %p243
      // Predicated region
      $region33: #{tpu_custom_call.1} parent=5 // pred_check
        _
      $region34: #{tpu_custom_call.1} parent=5 // pred_check_branch
        %246 = sbr.rel (%p243) target = $region36
      $region35: #{tpu_custom_call.1} parent=5 // pred_region
        %s247 = ssub.s32 %s19, 1
        %s248 = sand.u32 %s46, 1
        %s249 = scalar_lea.sflag [#allocation3], %s248
        %s250 = sand.u32 %s46, 1
        %s251 = smul.addr %s250, 512
        %s252 = scalar_lea.vmem [#allocation2], %s251
        // Predicated region
        $region37: #{tpu_custom_call.1} parent=35 // pred_check
          %p253 = pneg %p59
        $region38: #{tpu_custom_call.1} parent=35 // pred_check_branch
          %255 = sbr.rel (%p253) target = $region40
        $region39: #{tpu_custom_call.1} parent=35 // pred_region
          %257 = dma.done %s249, 8192
        $region40: #{tpu_custom_call.1} parent=35 // pred_fallthru
          _
        %s258 = sand.u32 %s24, 1
        %s259 = scalar_lea.sflag [#allocation6], %s258
        %s260 = sand.u32 %s74, 1
        %s261 = smul.addr %s260, 32
        %s262 = scalar_lea.vmem [#allocation5], %s261
        // Predicated region
        $region41: #{tpu_custom_call.1} parent=35 // pred_check
          %p263 = pneg %p87
        $region42: #{tpu_custom_call.1} parent=35 // pred_check_branch
          %265 = sbr.rel (%p263) target = $region44
        $region43: #{tpu_custom_call.1} parent=35 // pred_region
          %267 = dma.done %s259, 512
        $region44: #{tpu_custom_call.1} parent=35 // pred_fallthru
          _
        // Predicated region
        $region45: #{tpu_custom_call.1} parent=35 // pred_check
          %p268 = pneg %p108
        $region46: #{tpu_custom_call.1} parent=35 // pred_check_branch
          %270 = sbr.rel (%p268) target = $region48
        $region47: #{tpu_custom_call.1} parent=35 // pred_region
          %272 = dma.done [#allocation6], 512
        $region48: #{tpu_custom_call.1} parent=35 // pred_fallthru
          _
        %s273 = sand.u32 %s46, 1
        %s274 = scalar_lea.sflag [#allocation3], %s273
        %s275 = sand.u32 %s46, 1
        %s276 = smul.addr %s275, 512
        %s277 = scalar_lea.vmem [#allocation2], %s276
        %p278 = pneg %p59
        %p279 = pneg %p56
        %s280 = sand.u32 %s24, 1
        %s281 = scalar_lea.sflag [#allocation6], %s280
        %s282 = sand.u32 %s74, 1
        %s283 = smul.addr %s282, 32
        %s284 = scalar_lea.vmem [#allocation5], %s283
        %p285 = pneg %p87
        %p286 = pneg %p84
        %p287 = pneg %p108
        %p288 = pneg %p105
        %p289 = pneg %p129
        %p290 = pneg %p126
        %p291 = pneg %p157
        %p292 = pneg %p154
        %s293 = sand.u32 %s144, 1
        %s294 = scalar_lea.sflag [#allocation4], %s293
        %s295 = sand.u32 %s144, 1
        %s296 = smul.addr %s295, 32
        %s297 = scalar_lea.vmem [#allocation8], %s296
        %s298 = smul.u32 2, %s29
        %s299 = smul.u32 2, %s29
        %s300 = smul.u32 2, %s29
        %v301 = vld [vmem:[#allocation7] sm:$0xff]
        %v302 = vld [vmem:[#allocation7 + $0x8] sm:$0xff]
        %v303 = vld [vmem:[#allocation7 + $0x10] sm:$0xff]
        %v304 = vld [vmem:[#allocation7 + $0x18] sm:$0xff]
        %v305 = vld [vmem:[%s252] sm:$0xff]
        %v306 = vld [vmem:[%s252 + $0x8] sm:$0xff]
        %v307 = vld [vmem:[%s252 + $0x10] sm:$0xff]
        %v308 = vld [vmem:[%s252 + $0x18] sm:$0xff]
        %v309 = vld [vmem:[%s252 + $0x20] sm:$0xff]
        %v310 = vld [vmem:[%s252 + $0x28] sm:$0xff]
        %v311 = vld [vmem:[%s252 + $0x30] sm:$0xff]
        %v312 = vld [vmem:[%s252 + $0x38] sm:$0xff]
        %v313 = vld [vmem:[%s252 + $0x40] sm:$0xff]
        %v314 = vld [vmem:[%s252 + $0x48] sm:$0xff]
        %v315 = vld [vmem:[%s252 + $0x50] sm:$0xff]
        %v316 = vld [vmem:[%s252 + $0x58] sm:$0xff]
        %v317 = vld [vmem:[%s252 + $0x60] sm:$0xff]
        %v318 = vld [vmem:[%s252 + $0x68] sm:$0xff]
        %v319 = vld [vmem:[%s252 + $0x70] sm:$0xff]
        %v320 = vld [vmem:[%s252 + $0x78] sm:$0xff]
        %v321 = vld [vmem:[%s252 + $0x80] sm:$0xff]
        %v322 = vld [vmem:[%s252 + $0x88] sm:$0xff]
        %v323 = vld [vmem:[%s252 + $0x90] sm:$0xff]
        %v324 = vld [vmem:[%s252 + $0x98] sm:$0xff]
        %v325 = vld [vmem:[%s252 + $0xa0] sm:$0xff]
        %v326 = vld [vmem:[%s252 + $0xa8] sm:$0xff]
        %v327 = vld [vmem:[%s252 + $0xb0] sm:$0xff]
        %v328 = vld [vmem:[%s252 + $0xb8] sm:$0xff]
        %v329 = vld [vmem:[%s252 + $0xc0] sm:$0xff]
        %v330 = vld [vmem:[%s252 + $0xc8] sm:$0xff]
        %v331 = vld [vmem:[%s252 + $0xd0] sm:$0xff]
        %v332 = vld [vmem:[%s252 + $0xd8] sm:$0xff]
        %v333 = vld [vmem:[%s252 + $0xe0] sm:$0xff]
        %v334 = vld [vmem:[%s252 + $0xe8] sm:$0xff]
        %v335 = vld [vmem:[%s252 + $0xf0] sm:$0xff]
        %v336 = vld [vmem:[%s252 + $0xf8] sm:$0xff]
        %v337 = vld [vmem:[%s252 + $0x100] sm:$0xff]
        %v338 = vld [vmem:[%s252 + $0x108] sm:$0xff]
        %v339 = vld [vmem:[%s252 + $0x110] sm:$0xff]
        %v340 = vld [vmem:[%s252 + $0x118] sm:$0xff]
        %v341 = vld [vmem:[%s252 + $0x120] sm:$0xff]
        %v342 = vld [vmem:[%s252 + $0x128] sm:$0xff]
        %v343 = vld [vmem:[%s252 + $0x130] sm:$0xff]
        %v344 = vld [vmem:[%s252 + $0x138] sm:$0xff]
        %v345 = vld [vmem:[%s252 + $0x140] sm:$0xff]
        %v346 = vld [vmem:[%s252 + $0x148] sm:$0xff]
        %v347 = vld [vmem:[%s252 + $0x150] sm:$0xff]
        %v348 = vld [vmem:[%s252 + $0x158] sm:$0xff]
        %v349 = vld [vmem:[%s252 + $0x160] sm:$0xff]
        %v350 = vld [vmem:[%s252 + $0x168] sm:$0xff]
        %v351 = vld [vmem:[%s252 + $0x170] sm:$0xff]
        %v352 = vld [vmem:[%s252 + $0x178] sm:$0xff]
        %v353 = vld [vmem:[%s252 + $0x180] sm:$0xff]
        %v354 = vld [vmem:[%s252 + $0x188] sm:$0xff]
        %v355 = vld [vmem:[%s252 + $0x190] sm:$0xff]
        %v356 = vld [vmem:[%s252 + $0x198] sm:$0xff]
        %v357 = vld [vmem:[%s252 + $0x1a0] sm:$0xff]
        %v358 = vld [vmem:[%s252 + $0x1a8] sm:$0xff]
        %v359 = vld [vmem:[%s252 + $0x1b0] sm:$0xff]
        %v360 = vld [vmem:[%s252 + $0x1b8] sm:$0xff]
        %v361 = vld [vmem:[%s252 + $0x1c0] sm:$0xff]
        %v362 = vld [vmem:[%s252 + $0x1c8] sm:$0xff]
        %v363 = vld [vmem:[%s252 + $0x1d0] sm:$0xff]
        %v364 = vld [vmem:[%s252 + $0x1d8] sm:$0xff]
        %v365 = vld [vmem:[%s252 + $0x1e0] sm:$0xff]
        %v366 = vld [vmem:[%s252 + $0x1e8] sm:$0xff]
        %v367 = vld [vmem:[%s252 + $0x1f0] sm:$0xff]
        %v368 = vld [vmem:[%s252 + $0x1f8] sm:$0xff]
        %v369 = vld [vmem:[%s3] sm:$0xff]
        %v370 = vld [vmem:[%s3 + $0x8] sm:$0xff]
        %372 = vset.pattern.permute.xlu0 0
        %373 = vperm.xlu0 %372, %v369
        %v374 = vpop.permute.xlu0 %373
        %377 = vset.pattern.permute.xlu0 0
        %378 = vperm.xlu0 %377, %v370
        %v379 = vpop.permute.xlu0 %378
        %v381 = vand.u32 %v335, 4294901760
        %382 = vmatpush.msra.mxu0 %v381
        %v383 = vand.u32 %v333, 4294901760
        %384 = vmatpush.msra.mxu0 %v383
        %v385 = vand.u32 %v331, 4294901760
        %386 = vmatpush.msra.mxu0 %v385
        %v387 = vand.u32 %v329, 4294901760
        %388 = vmatpush.msra.mxu0 %v387
        %v389 = vand.u32 %v327, 4294901760
        %390 = vmatpush.msra.mxu0 %v389
        %v391 = vand.u32 %v325, 4294901760
        %392 = vmatpush.msra.mxu0 %v391
        %v393 = vand.u32 %v323, 4294901760
        %394 = vmatpush.msra.mxu0 %v393
        %v395 = vand.u32 %v321, 4294901760
        %396 = vmatpush.msra.mxu0 %v395
        %v397 = vand.u32 %v319, 4294901760
        %398 = vmatpush.msra.mxu0 %v397
        %v399 = vand.u32 %v317, 4294901760
        %400 = vmatpush.msra.mxu0 %v399
        %v401 = vand.u32 %v315, 4294901760
        %402 = vmatpush.msra.mxu0 %v401
        %v403 = vand.u32 %v313, 4294901760
        %404 = vmatpush.msra.mxu0 %v403
        %v405 = vand.u32 %v311, 4294901760
        %406 = vmatpush.msra.mxu0 %v405
        %v407 = vand.u32 %v309, 4294901760
        %408 = vmatpush.msra.mxu0 %v407
        %v409 = vand.u32 %v307, 4294901760
        %410 = vmatpush.msra.mxu0 %v409
        %v411 = vand.u32 %v305, 4294901760
        %412 = vmatpush.msra.mxu0 %v411
        %v413 = vand.u32 %v301, 4294901760
        %v414 = vsub.f32 %v301, %v413
        %v415 = vand.u32 %v414, 4294901760
        %v416 = vsub.f32 %v414, %v415
        %v417 = vand.u32 %v416, 4294901760
        %418 = vmatmul.f32.gmra.mxu0 %v417
        %v419 = vpop.f32.mrf.mxu0
        %v420 = vadd.f32 %v374, %v419
        %v421 = vand.u32 %v303, 4294901760
        %v422 = vsub.f32 %v303, %v421
        %v423 = vand.u32 %v422, 4294901760
        %v424 = vsub.f32 %v422, %v423
        %v425 = vand.u32 %v424, 4294901760
        %426 = vmatmul.f32.gmra.mxu0 %v425
        %v427 = vpop.f32.mrf.mxu0
        %v428 = vadd.f32 %v379, %v427
        %429 = vdwg.mxu0
        %v430 = vand.u32 %v335, 4294901760
        %v431 = vsub.f32 %v335, %v430
        %v432 = vand.u32 %v431, 4294901760
        %v433 = vsub.f32 %v431, %v432
        %v434 = vand.u32 %v433, 4294901760
        %435 = vmatpush.msra.mxu0 %v434
        %v436 = vand.u32 %v333, 4294901760
        %v437 = vsub.f32 %v333, %v436
        %v438 = vand.u32 %v437, 4294901760
        %v439 = vsub.f32 %v437, %v438
        %v440 = vand.u32 %v439, 4294901760
        %441 = vmatpush.msra.mxu0 %v440
        %v442 = vand.u32 %v331, 4294901760
        %v443 = vsub.f32 %v331, %v442
        %v444 = vand.u32 %v443, 4294901760
        %v445 = vsub.f32 %v443, %v444
        %v446 = vand.u32 %v445, 4294901760
        %447 = vmatpush.msra.mxu0 %v446
        %v448 = vand.u32 %v329, 4294901760
        %v449 = vsub.f32 %v329, %v448
        %v450 = vand.u32 %v449, 4294901760
        %v451 = vsub.f32 %v449, %v450
        %v452 = vand.u32 %v451, 4294901760
        %453 = vmatpush.msra.mxu0 %v452
        %v454 = vand.u32 %v327, 4294901760
        %v455 = vsub.f32 %v327, %v454
        %v456 = vand.u32 %v455, 4294901760
        %v457 = vsub.f32 %v455, %v456
        %v458 = vand.u32 %v457, 4294901760
        %459 = vmatpush.msra.mxu0 %v458
        %v460 = vand.u32 %v325, 4294901760
        %v461 = vsub.f32 %v325, %v460
        %v462 = vand.u32 %v461, 4294901760
        %v463 = vsub.f32 %v461, %v462
        %v464 = vand.u32 %v463, 4294901760
        %465 = vmatpush.msra.mxu0 %v464
        %v466 = vand.u32 %v323, 4294901760
        %v467 = vsub.f32 %v323, %v466
        %v468 = vand.u32 %v467, 4294901760
        %v469 = vsub.f32 %v467, %v468
        %v470 = vand.u32 %v469, 4294901760
        %471 = vmatpush.msra.mxu0 %v470
        %v472 = vand.u32 %v321, 4294901760
        %v473 = vsub.f32 %v321, %v472
        %v474 = vand.u32 %v473, 4294901760
        %v475 = vsub.f32 %v473, %v474
        %v476 = vand.u32 %v475, 4294901760
        %477 = vmatpush.msra.mxu0 %v476
        %v478 = vand.u32 %v319, 4294901760
        %v479 = vsub.f32 %v319, %v478
        %v480 = vand.u32 %v479, 4294901760
        %v481 = vsub.f32 %v479, %v480
        %v482 = vand.u32 %v481, 4294901760
        %483 = vmatpush.msra.mxu0 %v482
        %v484 = vand.u32 %v317, 4294901760
        %v485 = vsub.f32 %v317, %v484
        %v486 = vand.u32 %v485, 4294901760
        %v487 = vsub.f32 %v485, %v486
        %v488 = vand.u32 %v487, 4294901760
        %489 = vmatpush.msra.mxu0 %v488
        %v490 = vand.u32 %v315, 4294901760
        %v491 = vsub.f32 %v315, %v490
        %v492 = vand.u32 %v491, 4294901760
        %v493 = vsub.f32 %v491, %v492
        %v494 = vand.u32 %v493, 4294901760
        %495 = vmatpush.msra.mxu0 %v494
        %v496 = vand.u32 %v313, 4294901760
        %v497 = vsub.f32 %v313, %v496
        %v498 = vand.u32 %v497, 4294901760
        %v499 = vsub.f32 %v497, %v498
        %v500 = vand.u32 %v499, 4294901760
        %501 = vmatpush.msra.mxu0 %v500
        %v502 = vand.u32 %v311, 4294901760
        %v503 = vsub.f32 %v311, %v502
        %v504 = vand.u32 %v503, 4294901760
        %v505 = vsub.f32 %v503, %v504
        %v506 = vand.u32 %v505, 4294901760
        %507 = vmatpush.msra.mxu0 %v506
        %v508 = vand.u32 %v309, 4294901760
        %v509 = vsub.f32 %v309, %v508
        %v510 = vand.u32 %v509, 4294901760
        %v511 = vsub.f32 %v509, %v510
        %v512 = vand.u32 %v511, 4294901760
        %513 = vmatpush.msra.mxu0 %v512
        %v514 = vand.u32 %v307, 4294901760
        %v515 = vsub.f32 %v307, %v514
        %v516 = vand.u32 %v515, 4294901760
        %v517 = vsub.f32 %v515, %v516
        %v518 = vand.u32 %v517, 4294901760
        %519 = vmatpush.msra.mxu0 %v518
        %v520 = vand.u32 %v305, 4294901760
        %v521 = vsub.f32 %v305, %v520
        %v522 = vand.u32 %v521, 4294901760
        %v523 = vsub.f32 %v521, %v522
        %v524 = vand.u32 %v523, 4294901760
        %525 = vmatpush.msra.mxu0 %v524
        %v526 = vand.u32 %v301, 4294901760
        %527 = vmatmul.f32.gmra.mxu0 %v526
        %v528 = vpop.f32.mrf.mxu0
        %v529 = vadd.f32 %v420, %v528
        %v530 = vand.u32 %v303, 4294901760
        %531 = vmatmul.f32.gmra.mxu0 %v530
        %v532 = vpop.f32.mrf.mxu0
        %v533 = vadd.f32 %v428, %v532
        %534 = vdwg.mxu0
        %v535 = vand.u32 %v335, 4294901760
        %v536 = vsub.f32 %v335, %v535
        %537 = vmatpush.msra.mxu0 %v536
        %v538 = vand.u32 %v333, 4294901760
        %v539 = vsub.f32 %v333, %v538
        %540 = vmatpush.msra.mxu0 %v539
        %v541 = vand.u32 %v331, 4294901760
        %v542 = vsub.f32 %v331, %v541
        %543 = vmatpush.msra.mxu0 %v542
        %v544 = vand.u32 %v329, 4294901760
        %v545 = vsub.f32 %v329, %v544
        %546 = vmatpush.msra.mxu0 %v545
        %v547 = vand.u32 %v327, 4294901760
        %v548 = vsub.f32 %v327, %v547
        %549 = vmatpush.msra.mxu0 %v548
        %v550 = vand.u32 %v325, 4294901760
        %v551 = vsub.f32 %v325, %v550
        %552 = vmatpush.msra.mxu0 %v551
        %v553 = vand.u32 %v323, 4294901760
        %v554 = vsub.f32 %v323, %v553
        %555 = vmatpush.msra.mxu0 %v554
        %v556 = vand.u32 %v321, 4294901760
        %v557 = vsub.f32 %v321, %v556
        %558 = vmatpush.msra.mxu0 %v557
        %v559 = vand.u32 %v319, 4294901760
        %v560 = vsub.f32 %v319, %v559
        %561 = vmatpush.msra.mxu0 %v560
        %v562 = vand.u32 %v317, 4294901760
        %v563 = vsub.f32 %v317, %v562
        %564 = vmatpush.msra.mxu0 %v563
        %v565 = vand.u32 %v315, 4294901760
        %v566 = vsub.f32 %v315, %v565
        %567 = vmatpush.msra.mxu0 %v566
        %v568 = vand.u32 %v313, 4294901760
        %v569 = vsub.f32 %v313, %v568
        %570 = vmatpush.msra.mxu0 %v569
        %v571 = vand.u32 %v311, 4294901760
        %v572 = vsub.f32 %v311, %v571
        %573 = vmatpush.msra.mxu0 %v572
        %v574 = vand.u32 %v309, 4294901760
        %v575 = vsub.f32 %v309, %v574
        %576 = vmatpush.msra.mxu0 %v575
        %v577 = vand.u32 %v307, 4294901760
        %v578 = vsub.f32 %v307, %v577
        %579 = vmatpush.msra.mxu0 %v578
        %v580 = vand.u32 %v305, 4294901760
        %v581 = vsub.f32 %v305, %v580
        %582 = vmatpush.msra.mxu0 %v581
        %v583 = vand.u32 %v301, 4294901760
        %v584 = vsub.f32 %v301, %v583
        %585 = vmatmul.f32.gmra.mxu0 %v584
        %v586 = vpop.f32.mrf.mxu0
        %v587 = vadd.f32 %v529, %v586
        %v588 = vand.u32 %v303, 4294901760
        %v589 = vsub.f32 %v303, %v588
        %590 = vmatmul.f32.gmra.mxu0 %v589
        %v591 = vpop.f32.mrf.mxu0
        %v592 = vadd.f32 %v533, %v591
        %593 = vdwg.mxu0
        %v594 = vand.u32 %v335, 4294901760
        %595 = vmatpush.msra.mxu0 %v594
        %v596 = vand.u32 %v333, 4294901760
        %597 = vmatpush.msra.mxu0 %v596
        %v598 = vand.u32 %v331, 4294901760
        %599 = vmatpush.msra.mxu0 %v598
        %v600 = vand.u32 %v329, 4294901760
        %601 = vmatpush.msra.mxu0 %v600
        %v602 = vand.u32 %v327, 4294901760
        %603 = vmatpush.msra.mxu0 %v602
        %v604 = vand.u32 %v325, 4294901760
        %605 = vmatpush.msra.mxu0 %v604
        %v606 = vand.u32 %v323, 4294901760
        %607 = vmatpush.msra.mxu0 %v606
        %v608 = vand.u32 %v321, 4294901760
        %609 = vmatpush.msra.mxu0 %v608
        %v610 = vand.u32 %v319, 4294901760
        %611 = vmatpush.msra.mxu0 %v610
        %v612 = vand.u32 %v317, 4294901760
        %613 = vmatpush.msra.mxu0 %v612
        %v614 = vand.u32 %v315, 4294901760
        %615 = vmatpush.msra.mxu0 %v614
        %v616 = vand.u32 %v313, 4294901760
        %617 = vmatpush.msra.mxu0 %v616
        %v618 = vand.u32 %v311, 4294901760
        %619 = vmatpush.msra.mxu0 %v618
        %v620 = vand.u32 %v309, 4294901760
        %621 = vmatpush.msra.mxu0 %v620
        %v622 = vand.u32 %v307, 4294901760
        %623 = vmatpush.msra.mxu0 %v622
        %v624 = vand.u32 %v305, 4294901760
        %625 = vmatpush.msra.mxu0 %v624
        %v626 = vand.u32 %v301, 4294901760
        %v627 = vsub.f32 %v301, %v626
        %v628 = vand.u32 %v627, 4294901760
        %629 = vmatmul.f32.gmra.mxu0 %v628
        %v630 = vpop.f32.mrf.mxu0
        %v631 = vadd.f32 %v587, %v630
        %v632 = vand.u32 %v303, 4294901760
        %v633 = vsub.f32 %v303, %v632
        %v634 = vand.u32 %v633, 4294901760
        %635 = vmatmul.f32.gmra.mxu0 %v634
        %v636 = vpop.f32.mrf.mxu0
        %v637 = vadd.f32 %v592, %v636
        %638 = vdwg.mxu0
        %v639 = vand.u32 %v335, 4294901760
        %v640 = vsub.f32 %v335, %v639
        %v641 = vand.u32 %v640, 4294901760
        %642 = vmatpush.msra.mxu0 %v641
        %v643 = vand.u32 %v333, 4294901760
        %v644 = vsub.f32 %v333, %v643
        %v645 = vand.u32 %v644, 4294901760
        %646 = vmatpush.msra.mxu0 %v645
        %v647 = vand.u32 %v331, 4294901760
        %v648 = vsub.f32 %v331, %v647
        %v649 = vand.u32 %v648, 4294901760
        %650 = vmatpush.msra.mxu0 %v649
        %v651 = vand.u32 %v329, 4294901760
        %v652 = vsub.f32 %v329, %v651
        %v653 = vand.u32 %v652, 4294901760
        %654 = vmatpush.msra.mxu0 %v653
        %v655 = vand.u32 %v327, 4294901760
        %v656 = vsub.f32 %v327, %v655
        %v657 = vand.u32 %v656, 4294901760
        %658 = vmatpush.msra.mxu0 %v657
        %v659 = vand.u32 %v325, 4294901760
        %v660 = vsub.f32 %v325, %v659
        %v661 = vand.u32 %v660, 4294901760
        %662 = vmatpush.msra.mxu0 %v661
        %v663 = vand.u32 %v323, 4294901760
        %v664 = vsub.f32 %v323, %v663
        %v665 = vand.u32 %v664, 4294901760
        %666 = vmatpush.msra.mxu0 %v665
        %v667 = vand.u32 %v321, 4294901760
        %v668 = vsub.f32 %v321, %v667
        %v669 = vand.u32 %v668, 4294901760
        %670 = vmatpush.msra.mxu0 %v669
        %v671 = vand.u32 %v319, 4294901760
        %v672 = vsub.f32 %v319, %v671
        %v673 = vand.u32 %v672, 4294901760
        %674 = vmatpush.msra.mxu0 %v673
        %v675 = vand.u32 %v317, 4294901760
        %v676 = vsub.f32 %v317, %v675
        %v677 = vand.u32 %v676, 4294901760
        %678 = vmatpush.msra.mxu0 %v677
        %v679 = vand.u32 %v315, 4294901760
        %v680 = vsub.f32 %v315, %v679
        %v681 = vand.u32 %v680, 4294901760
        %682 = vmatpush.msra.mxu0 %v681
        %v683 = vand.u32 %v313, 4294901760
        %v684 = vsub.f32 %v313, %v683
        %v685 = vand.u32 %v684, 4294901760
        %686 = vmatpush.msra.mxu0 %v685
        %v687 = vand.u32 %v311, 4294901760
        %v688 = vsub.f32 %v311, %v687
        %v689 = vand.u32 %v688, 4294901760
        %690 = vmatpush.msra.mxu0 %v689
        %v691 = vand.u32 %v309, 4294901760
        %v692 = vsub.f32 %v309, %v691
        %v693 = vand.u32 %v692, 4294901760
        %694 = vmatpush.msra.mxu0 %v693
        %v695 = vand.u32 %v307, 4294901760
        %v696 = vsub.f32 %v307, %v695
        %v697 = vand.u32 %v696, 4294901760
        %698 = vmatpush.msra.mxu0 %v697
        %v699 = vand.u32 %v305, 4294901760
        %v700 = vsub.f32 %v305, %v699
        %v701 = vand.u32 %v700, 4294901760
        %702 = vmatpush.msra.mxu0 %v701
        %v703 = vand.u32 %v301, 4294901760
        %704 = vmatmul.f32.gmra.mxu0 %v703
        %v705 = vpop.f32.mrf.mxu0
        %v706 = vadd.f32 %v631, %v705
        %v707 = vand.u32 %v303, 4294901760
        %708 = vmatmul.f32.gmra.mxu0 %v707
        %v709 = vpop.f32.mrf.mxu0
        %v710 = vadd.f32 %v637, %v709
        %711 = vdwg.mxu0
        %v712 = vand.u32 %v335, 4294901760
        %713 = vmatpush.msra.mxu0 %v712
        %v714 = vand.u32 %v333, 4294901760
        %715 = vmatpush.msra.mxu0 %v714
        %v716 = vand.u32 %v331, 4294901760
        %717 = vmatpush.msra.mxu0 %v716
        %v718 = vand.u32 %v329, 4294901760
        %719 = vmatpush.msra.mxu0 %v718
        %v720 = vand.u32 %v327, 4294901760
        %721 = vmatpush.msra.mxu0 %v720
        %v722 = vand.u32 %v325, 4294901760
        %723 = vmatpush.msra.mxu0 %v722
        %v724 = vand.u32 %v323, 4294901760
        %725 = vmatpush.msra.mxu0 %v724
        %v726 = vand.u32 %v321, 4294901760
        %727 = vmatpush.msra.mxu0 %v726
        %v728 = vand.u32 %v319, 4294901760
        %729 = vmatpush.msra.mxu0 %v728
        %v730 = vand.u32 %v317, 4294901760
        %731 = vmatpush.msra.mxu0 %v730
        %v732 = vand.u32 %v315, 4294901760
        %733 = vmatpush.msra.mxu0 %v732
        %v734 = vand.u32 %v313, 4294901760
        %735 = vmatpush.msra.mxu0 %v734
        %v736 = vand.u32 %v311, 4294901760
        %737 = vmatpush.msra.mxu0 %v736
        %v738 = vand.u32 %v309, 4294901760
        %739 = vmatpush.msra.mxu0 %v738
        %v740 = vand.u32 %v307, 4294901760
        %741 = vmatpush.msra.mxu0 %v740
        %v742 = vand.u32 %v305, 4294901760
        %743 = vmatpush.msra.mxu0 %v742
        %v744 = vand.u32 %v301, 4294901760
        %745 = vmatmul.f32.gmra.mxu0 %v744
        %v746 = vpop.f32.mrf.mxu0
        %v747 = vadd.f32 %v706, %v746
        %v748 = vand.u32 %v303, 4294901760
        %749 = vmatmul.f32.gmra.mxu0 %v748
        %v750 = vpop.f32.mrf.mxu0
        %v751 = vadd.f32 %v710, %v750
        %752 = vdwg.mxu0
        %v753 = vand.u32 %v367, 4294901760
        %754 = vmatpush.msra.mxu0 %v753
        %v755 = vand.u32 %v365, 4294901760
        %756 = vmatpush.msra.mxu0 %v755
        %v757 = vand.u32 %v363, 4294901760
        %758 = vmatpush.msra.mxu0 %v757
        %v759 = vand.u32 %v361, 4294901760
        %760 = vmatpush.msra.mxu0 %v759
        %v761 = vand.u32 %v359, 4294901760
        %762 = vmatpush.msra.mxu0 %v761
        %v763 = vand.u32 %v357, 4294901760
        %764 = vmatpush.msra.mxu0 %v763
        %v765 = vand.u32 %v355, 4294901760
        %766 = vmatpush.msra.mxu0 %v765
        %v767 = vand.u32 %v353, 4294901760
        %768 = vmatpush.msra.mxu0 %v767
        %v769 = vand.u32 %v351, 4294901760
        %770 = vmatpush.msra.mxu0 %v769
        %v771 = vand.u32 %v349, 4294901760
        %772 = vmatpush.msra.mxu0 %v771
        %v773 = vand.u32 %v347, 4294901760
        %774 = vmatpush.msra.mxu0 %v773
        %v775 = vand.u32 %v345, 4294901760
        %776 = vmatpush.msra.mxu0 %v775
        %v777 = vand.u32 %v343, 4294901760
        %778 = vmatpush.msra.mxu0 %v777
        %v779 = vand.u32 %v341, 4294901760
        %780 = vmatpush.msra.mxu0 %v779
        %v781 = vand.u32 %v339, 4294901760
        %782 = vmatpush.msra.mxu0 %v781
        %v783 = vand.u32 %v337, 4294901760
        %784 = vmatpush.msra.mxu0 %v783
        %v785 = vand.u32 %v302, 4294901760
        %v786 = vsub.f32 %v302, %v785
        %v787 = vand.u32 %v786, 4294901760
        %v788 = vsub.f32 %v786, %v787
        %v789 = vand.u32 %v788, 4294901760
        %790 = vmatmul.f32.gmra.mxu0 %v789
        %v791 = vpop.f32.mrf.mxu0
        %v792 = vadd.f32 %v747, %v791
        %v793 = vand.u32 %v304, 4294901760
        %v794 = vsub.f32 %v304, %v793
        %v795 = vand.u32 %v794, 4294901760
        %v796 = vsub.f32 %v794, %v795
        %v797 = vand.u32 %v796, 4294901760
        %798 = vmatmul.f32.gmra.mxu0 %v797
        %v799 = vpop.f32.mrf.mxu0
        %v800 = vadd.f32 %v751, %v799
        %801 = vdwg.mxu0
        %v802 = vand.u32 %v367, 4294901760
        %v803 = vsub.f32 %v367, %v802
        %v804 = vand.u32 %v803, 4294901760
        %v805 = vsub.f32 %v803, %v804
        %v806 = vand.u32 %v805, 4294901760
        %807 = vmatpush.msra.mxu0 %v806
        %v808 = vand.u32 %v365, 4294901760
        %v809 = vsub.f32 %v365, %v808
        %v810 = vand.u32 %v809, 4294901760
        %v811 = vsub.f32 %v809, %v810
        %v812 = vand.u32 %v811, 4294901760
        %813 = vmatpush.msra.mxu0 %v812
        %v814 = vand.u32 %v363, 4294901760
        %v815 = vsub.f32 %v363, %v814
        %v816 = vand.u32 %v815, 4294901760
        %v817 = vsub.f32 %v815, %v816
        %v818 = vand.u32 %v817, 4294901760
        %819 = vmatpush.msra.mxu0 %v818
        %v820 = vand.u32 %v361, 4294901760
        %v821 = vsub.f32 %v361, %v820
        %v822 = vand.u32 %v821, 4294901760
        %v823 = vsub.f32 %v821, %v822
        %v824 = vand.u32 %v823, 4294901760
        %825 = vmatpush.msra.mxu0 %v824
        %v826 = vand.u32 %v359, 4294901760
        %v827 = vsub.f32 %v359, %v826
        %v828 = vand.u32 %v827, 4294901760
        %v829 = vsub.f32 %v827, %v828
        %v830 = vand.u32 %v829, 4294901760
        %831 = vmatpush.msra.mxu0 %v830
        %v832 = vand.u32 %v357, 4294901760
        %v833 = vsub.f32 %v357, %v832
        %v834 = vand.u32 %v833, 4294901760
        %v835 = vsub.f32 %v833, %v834
        %v836 = vand.u32 %v835, 4294901760
        %837 = vmatpush.msra.mxu0 %v836
        %v838 = vand.u32 %v355, 4294901760
        %v839 = vsub.f32 %v355, %v838
        %v840 = vand.u32 %v839, 4294901760
        %v841 = vsub.f32 %v839, %v840
        %v842 = vand.u32 %v841, 4294901760
        %843 = vmatpush.msra.mxu0 %v842
        %v844 = vand.u32 %v353, 4294901760
        %v845 = vsub.f32 %v353, %v844
        %v846 = vand.u32 %v845, 4294901760
        %v847 = vsub.f32 %v845, %v846
        %v848 = vand.u32 %v847, 4294901760
        %849 = vmatpush.msra.mxu0 %v848
        %v850 = vand.u32 %v351, 4294901760
        %v851 = vsub.f32 %v351, %v850
        %v852 = vand.u32 %v851, 4294901760
        %v853 = vsub.f32 %v851, %v852
        %v854 = vand.u32 %v853, 4294901760
        %855 = vmatpush.msra.mxu0 %v854
        %v856 = vand.u32 %v349, 4294901760
        %v857 = vsub.f32 %v349, %v856
        %v858 = vand.u32 %v857, 4294901760
        %v859 = vsub.f32 %v857, %v858
        %v860 = vand.u32 %v859, 4294901760
        %861 = vmatpush.msra.mxu0 %v860
        %v862 = vand.u32 %v347, 4294901760
        %v863 = vsub.f32 %v347, %v862
        %v864 = vand.u32 %v863, 4294901760
        %v865 = vsub.f32 %v863, %v864
        %v866 = vand.u32 %v865, 4294901760
        %867 = vmatpush.msra.mxu0 %v866
        %v868 = vand.u32 %v345, 4294901760
        %v869 = vsub.f32 %v345, %v868
        %v870 = vand.u32 %v869, 4294901760
        %v871 = vsub.f32 %v869, %v870
        %v872 = vand.u32 %v871, 4294901760
        %873 = vmatpush.msra.mxu0 %v872
        %v874 = vand.u32 %v343, 4294901760
        %v875 = vsub.f32 %v343, %v874
        %v876 = vand.u32 %v875, 4294901760
        %v877 = vsub.f32 %v875, %v876
        %v878 = vand.u32 %v877, 4294901760
        %879 = vmatpush.msra.mxu0 %v878
        %v880 = vand.u32 %v341, 4294901760
        %v881 = vsub.f32 %v341, %v880
        %v882 = vand.u32 %v881, 4294901760
        %v883 = vsub.f32 %v881, %v882
        %v884 = vand.u32 %v883, 4294901760
        %885 = vmatpush.msra.mxu0 %v884
        %v886 = vand.u32 %v339, 4294901760
        %v887 = vsub.f32 %v339, %v886
        %v888 = vand.u32 %v887, 4294901760
        %v889 = vsub.f32 %v887, %v888
        %v890 = vand.u32 %v889, 4294901760
        %891 = vmatpush.msra.mxu0 %v890
        %v892 = vand.u32 %v337, 4294901760
        %v893 = vsub.f32 %v337, %v892
        %v894 = vand.u32 %v893, 4294901760
        %v895 = vsub.f32 %v893, %v894
        %v896 = vand.u32 %v895, 4294901760
        %897 = vmatpush.msra.mxu0 %v896
        %v898 = vand.u32 %v302, 4294901760
        %899 = vmatmul.f32.gmra.mxu0 %v898
        %v900 = vpop.f32.mrf.mxu0
        %v901 = vadd.f32 %v792, %v900
        %v902 = vand.u32 %v304, 4294901760
        %903 = vmatmul.f32.gmra.mxu0 %v902
        %v904 = vpop.f32.mrf.mxu0
        %v905 = vadd.f32 %v800, %v904
        %906 = vdwg.mxu0
        %v907 = vand.u32 %v367, 4294901760
        %v908 = vsub.f32 %v367, %v907
        %909 = vmatpush.msra.mxu0 %v908
        %v910 = vand.u32 %v365, 4294901760
        %v911 = vsub.f32 %v365, %v910
        %912 = vmatpush.msra.mxu0 %v911
        %v913 = vand.u32 %v363, 4294901760
        %v914 = vsub.f32 %v363, %v913
        %915 = vmatpush.msra.mxu0 %v914
        %v916 = vand.u32 %v361, 4294901760
        %v917 = vsub.f32 %v361, %v916
        %918 = vmatpush.msra.mxu0 %v917
        %v919 = vand.u32 %v359, 4294901760
        %v920 = vsub.f32 %v359, %v919
        %921 = vmatpush.msra.mxu0 %v920
        %v922 = vand.u32 %v357, 4294901760
        %v923 = vsub.f32 %v357, %v922
        %924 = vmatpush.msra.mxu0 %v923
        %v925 = vand.u32 %v355, 4294901760
        %v926 = vsub.f32 %v355, %v925
        %927 = vmatpush.msra.mxu0 %v926
        %v928 = vand.u32 %v353, 4294901760
        %v929 = vsub.f32 %v353, %v928
        %930 = vmatpush.msra.mxu0 %v929
        %v931 = vand.u32 %v351, 4294901760
        %v932 = vsub.f32 %v351, %v931
        %933 = vmatpush.msra.mxu0 %v932
        %v934 = vand.u32 %v349, 4294901760
        %v935 = vsub.f32 %v349, %v934
        %936 = vmatpush.msra.mxu0 %v935
        %v937 = vand.u32 %v347, 4294901760
        %v938 = vsub.f32 %v347, %v937
        %939 = vmatpush.msra.mxu0 %v938
        %v940 = vand.u32 %v345, 4294901760
        %v941 = vsub.f32 %v345, %v940
        %942 = vmatpush.msra.mxu0 %v941
        %v943 = vand.u32 %v343, 4294901760
        %v944 = vsub.f32 %v343, %v943
        %945 = vmatpush.msra.mxu0 %v944
        %v946 = vand.u32 %v341, 4294901760
        %v947 = vsub.f32 %v341, %v946
        %948 = vmatpush.msra.mxu0 %v947
        %v949 = vand.u32 %v339, 4294901760
        %v950 = vsub.f32 %v339, %v949
        %951 = vmatpush.msra.mxu0 %v950
        %v952 = vand.u32 %v337, 4294901760
        %v953 = vsub.f32 %v337, %v952
        %954 = vmatpush.msra.mxu0 %v953
        %v955 = vand.u32 %v302, 4294901760
        %v956 = vsub.f32 %v302, %v955
        %957 = vmatmul.f32.gmra.mxu0 %v956
        %v958 = vpop.f32.mrf.mxu0
        %v959 = vadd.f32 %v901, %v958
        %v960 = vand.u32 %v304, 4294901760
        %v961 = vsub.f32 %v304, %v960
        %962 = vmatmul.f32.gmra.mxu0 %v961
        %v963 = vpop.f32.mrf.mxu0
        %v964 = vadd.f32 %v905, %v963
        %965 = vdwg.mxu0
        %v966 = vand.u32 %v367, 4294901760
        %967 = vmatpush.msra.mxu0 %v966
        %v968 = vand.u32 %v365, 4294901760
        %969 = vmatpush.msra.mxu0 %v968
        %v970 = vand.u32 %v363, 4294901760
        %971 = vmatpush.msra.mxu0 %v970
        %v972 = vand.u32 %v361, 4294901760
        %973 = vmatpush.msra.mxu0 %v972
        %v974 = vand.u32 %v359, 4294901760
        %975 = vmatpush.msra.mxu0 %v974
        %v976 = vand.u32 %v357, 4294901760
        %977 = vmatpush.msra.mxu0 %v976
        %v978 = vand.u32 %v355, 4294901760
        %979 = vmatpush.msra.mxu0 %v978
        %v980 = vand.u32 %v353, 4294901760
        %981 = vmatpush.msra.mxu0 %v980
        %v982 = vand.u32 %v351, 4294901760
        %983 = vmatpush.msra.mxu0 %v982
        %v984 = vand.u32 %v349, 4294901760
        %985 = vmatpush.msra.mxu0 %v984
        %v986 = vand.u32 %v347, 4294901760
        %987 = vmatpush.msra.mxu0 %v986
        %v988 = vand.u32 %v345, 4294901760
        %989 = vmatpush.msra.mxu0 %v988
        %v990 = vand.u32 %v343, 4294901760
        %991 = vmatpush.msra.mxu0 %v990
        %v992 = vand.u32 %v341, 4294901760
        %993 = vmatpush.msra.mxu0 %v992
        %v994 = vand.u32 %v339, 4294901760
        %995 = vmatpush.msra.mxu0 %v994
        %v996 = vand.u32 %v337, 4294901760
        %997 = vmatpush.msra.mxu0 %v996
        %v998 = vand.u32 %v302, 4294901760
        %v999 = vsub.f32 %v302, %v998
        %v1000 = vand.u32 %v999, 4294901760
        %1001 = vmatmul.f32.gmra.mxu0 %v1000
        %v1002 = vpop.f32.mrf.mxu0
        %v1003 = vadd.f32 %v959, %v1002
        %v1004 = vand.u32 %v304, 4294901760
        %v1005 = vsub.f32 %v304, %v1004
        %v1006 = vand.u32 %v1005, 4294901760
        %1007 = vmatmul.f32.gmra.mxu0 %v1006
        %v1008 = vpop.f32.mrf.mxu0
        %v1009 = vadd.f32 %v964, %v1008
        %1010 = vdwg.mxu0
        %v1011 = vand.u32 %v367, 4294901760
        %v1012 = vsub.f32 %v367, %v1011
        %v1013 = vand.u32 %v1012, 4294901760
        %1014 = vmatpush.msra.mxu0 %v1013
        %v1015 = vand.u32 %v365, 4294901760
        %v1016 = vsub.f32 %v365, %v1015
        %v1017 = vand.u32 %v1016, 4294901760
        %1018 = vmatpush.msra.mxu0 %v1017
        %v1019 = vand.u32 %v363, 4294901760
        %v1020 = vsub.f32 %v363, %v1019
        %v1021 = vand.u32 %v1020, 4294901760
        %1022 = vmatpush.msra.mxu0 %v1021
        %v1023 = vand.u32 %v361, 4294901760
        %v1024 = vsub.f32 %v361, %v1023
        %v1025 = vand.u32 %v1024, 4294901760
        %1026 = vmatpush.msra.mxu0 %v1025
        %v1027 = vand.u32 %v359, 4294901760
        %v1028 = vsub.f32 %v359, %v1027
        %v1029 = vand.u32 %v1028, 4294901760
        %1030 = vmatpush.msra.mxu0 %v1029
        %v1031 = vand.u32 %v357, 4294901760
        %v1032 = vsub.f32 %v357, %v1031
        %v1033 = vand.u32 %v1032, 4294901760
        %1034 = vmatpush.msra.mxu0 %v1033
        %v1035 = vand.u32 %v355, 4294901760
        %v1036 = vsub.f32 %v355, %v1035
        %v1037 = vand.u32 %v1036, 4294901760
        %1038 = vmatpush.msra.mxu0 %v1037
        %v1039 = vand.u32 %v353, 4294901760
        %v1040 = vsub.f32 %v353, %v1039
        %v1041 = vand.u32 %v1040, 4294901760
        %1042 = vmatpush.msra.mxu0 %v1041
        %v1043 = vand.u32 %v351, 4294901760
        %v1044 = vsub.f32 %v351, %v1043
        %v1045 = vand.u32 %v1044, 4294901760
        %1046 = vmatpush.msra.mxu0 %v1045
        %v1047 = vand.u32 %v349, 4294901760
        %v1048 = vsub.f32 %v349, %v1047
        %v1049 = vand.u32 %v1048, 4294901760
        %1050 = vmatpush.msra.mxu0 %v1049
        %v1051 = vand.u32 %v347, 4294901760
        %v1052 = vsub.f32 %v347, %v1051
        %v1053 = vand.u32 %v1052, 4294901760
        %1054 = vmatpush.msra.mxu0 %v1053
        %v1055 = vand.u32 %v345, 4294901760
        %v1056 = vsub.f32 %v345, %v1055
        %v1057 = vand.u32 %v1056, 4294901760
        %1058 = vmatpush.msra.mxu0 %v1057
        %v1059 = vand.u32 %v343, 4294901760
        %v1060 = vsub.f32 %v343, %v1059
        %v1061 = vand.u32 %v1060, 4294901760
        %1062 = vmatpush.msra.mxu0 %v1061
        %v1063 = vand.u32 %v341, 4294901760
        %v1064 = vsub.f32 %v341, %v1063
        %v1065 = vand.u32 %v1064, 4294901760
        %1066 = vmatpush.msra.mxu0 %v1065
        %v1067 = vand.u32 %v339, 4294901760
        %v1068 = vsub.f32 %v339, %v1067
        %v1069 = vand.u32 %v1068, 4294901760
        %1070 = vmatpush.msra.mxu0 %v1069
        %v1071 = vand.u32 %v337, 4294901760
        %v1072 = vsub.f32 %v337, %v1071
        %v1073 = vand.u32 %v1072, 4294901760
        %1074 = vmatpush.msra.mxu0 %v1073
        %v1075 = vand.u32 %v302, 4294901760
        %1076 = vmatmul.f32.gmra.mxu0 %v1075
        %v1077 = vpop.f32.mrf.mxu0
        %v1078 = vadd.f32 %v1003, %v1077
        %v1079 = vand.u32 %v304, 4294901760
        %1080 = vmatmul.f32.gmra.mxu0 %v1079
        %v1081 = vpop.f32.mrf.mxu0
        %v1082 = vadd.f32 %v1009, %v1081
        %1083 = vdwg.mxu0
        %v1084 = vand.u32 %v367, 4294901760
        %1085 = vmatpush.msra.mxu0 %v1084
        %v1086 = vand.u32 %v365, 4294901760
        %1087 = vmatpush.msra.mxu0 %v1086
        %v1088 = vand.u32 %v363, 4294901760
        %1089 = vmatpush.msra.mxu0 %v1088
        %v1090 = vand.u32 %v361, 4294901760
        %1091 = vmatpush.msra.mxu0 %v1090
        %v1092 = vand.u32 %v359, 4294901760
        %1093 = vmatpush.msra.mxu0 %v1092
        %v1094 = vand.u32 %v357, 4294901760
        %1095 = vmatpush.msra.mxu0 %v1094
        %v1096 = vand.u32 %v355, 4294901760
        %1097 = vmatpush.msra.mxu0 %v1096
        %v1098 = vand.u32 %v353, 4294901760
        %1099 = vmatpush.msra.mxu0 %v1098
        %v1100 = vand.u32 %v351, 4294901760
        %1101 = vmatpush.msra.mxu0 %v1100
        %v1102 = vand.u32 %v349, 4294901760
        %1103 = vmatpush.msra.mxu0 %v1102
        %v1104 = vand.u32 %v347, 4294901760
        %1105 = vmatpush.msra.mxu0 %v1104
        %v1106 = vand.u32 %v345, 4294901760
        %1107 = vmatpush.msra.mxu0 %v1106
        %v1108 = vand.u32 %v343, 4294901760
        %1109 = vmatpush.msra.mxu0 %v1108
        %v1110 = vand.u32 %v341, 4294901760
        %1111 = vmatpush.msra.mxu0 %v1110
        %v1112 = vand.u32 %v339, 4294901760
        %1113 = vmatpush.msra.mxu0 %v1112
        %v1114 = vand.u32 %v337, 4294901760
        %1115 = vmatpush.msra.mxu0 %v1114
        %v1116 = vand.u32 %v302, 4294901760
        %1117 = vmatmul.f32.gmra.mxu0 %v1116
        %v1118 = vpop.f32.mrf.mxu0
        %v1119 = vadd.f32 %v1078, %v1118
        %v1120 = vand.u32 %v304, 4294901760
        %1121 = vmatmul.f32.gmra.mxu0 %v1120
        %v1122 = vpop.f32.mrf.mxu0
        %v1123 = vadd.f32 %v1082, %v1122
        %1124 = vdwg.mxu0
        %v1125 = vand.u32 %v336, 4294901760
        %1126 = vmatpush.msra.mxu0 %v1125
        %v1127 = vand.u32 %v334, 4294901760
        %1128 = vmatpush.msra.mxu0 %v1127
        %v1129 = vand.u32 %v332, 4294901760
        %1130 = vmatpush.msra.mxu0 %v1129
        %v1131 = vand.u32 %v330, 4294901760
        %1132 = vmatpush.msra.mxu0 %v1131
        %v1133 = vand.u32 %v328, 4294901760
        %1134 = vmatpush.msra.mxu0 %v1133
        %v1135 = vand.u32 %v326, 4294901760
        %1136 = vmatpush.msra.mxu0 %v1135
        %v1137 = vand.u32 %v324, 4294901760
        %1138 = vmatpush.msra.mxu0 %v1137
        %v1139 = vand.u32 %v322, 4294901760
        %1140 = vmatpush.msra.mxu0 %v1139
        %v1141 = vand.u32 %v320, 4294901760
        %1142 = vmatpush.msra.mxu0 %v1141
        %v1143 = vand.u32 %v318, 4294901760
        %1144 = vmatpush.msra.mxu0 %v1143
        %v1145 = vand.u32 %v316, 4294901760
        %1146 = vmatpush.msra.mxu0 %v1145
        %v1147 = vand.u32 %v314, 4294901760
        %1148 = vmatpush.msra.mxu0 %v1147
        %v1149 = vand.u32 %v312, 4294901760
        %1150 = vmatpush.msra.mxu0 %v1149
        %v1151 = vand.u32 %v310, 4294901760
        %1152 = vmatpush.msra.mxu0 %v1151
        %v1153 = vand.u32 %v308, 4294901760
        %1154 = vmatpush.msra.mxu0 %v1153
        %v1155 = vand.u32 %v306, 4294901760
        %1156 = vmatpush.msra.mxu0 %v1155
        %v1157 = vand.u32 %v301, 4294901760
        %v1158 = vsub.f32 %v301, %v1157
        %v1159 = vand.u32 %v1158, 4294901760
        %v1160 = vsub.f32 %v1158, %v1159
        %v1161 = vand.u32 %v1160, 4294901760
        %1162 = vmatmul.f32.gmra.mxu0 %v1161
        %v1163 = vpop.f32.mrf.mxu0
        %v1164 = vadd.f32 %v374, %v1163
        %v1165 = vand.u32 %v303, 4294901760
        %v1166 = vsub.f32 %v303, %v1165
        %v1167 = vand.u32 %v1166, 4294901760
        %v1168 = vsub.f32 %v1166, %v1167
        %v1169 = vand.u32 %v1168, 4294901760
        %1170 = vmatmul.f32.gmra.mxu0 %v1169
        %v1171 = vpop.f32.mrf.mxu0
        %v1172 = vadd.f32 %v379, %v1171
        %1173 = vdwg.mxu0
        %v1174 = vand.u32 %v336, 4294901760
        %v1175 = vsub.f32 %v336, %v1174
        %v1176 = vand.u32 %v1175, 4294901760
        %v1177 = vsub.f32 %v1175, %v1176
        %v1178 = vand.u32 %v1177, 4294901760
        %1179 = vmatpush.msra.mxu0 %v1178
        %v1180 = vand.u32 %v334, 4294901760
        %v1181 = vsub.f32 %v334, %v1180
        %v1182 = vand.u32 %v1181, 4294901760
        %v1183 = vsub.f32 %v1181, %v1182
        %v1184 = vand.u32 %v1183, 4294901760
        %1185 = vmatpush.msra.mxu0 %v1184
        %v1186 = vand.u32 %v332, 4294901760
        %v1187 = vsub.f32 %v332, %v1186
        %v1188 = vand.u32 %v1187, 4294901760
        %v1189 = vsub.f32 %v1187, %v1188
        %v1190 = vand.u32 %v1189, 4294901760
        %1191 = vmatpush.msra.mxu0 %v1190
        %v1192 = vand.u32 %v330, 4294901760
        %v1193 = vsub.f32 %v330, %v1192
        %v1194 = vand.u32 %v1193, 4294901760
        %v1195 = vsub.f32 %v1193, %v1194
        %v1196 = vand.u32 %v1195, 4294901760
        %1197 = vmatpush.msra.mxu0 %v1196
        %v1198 = vand.u32 %v328, 4294901760
        %v1199 = vsub.f32 %v328, %v1198
        %v1200 = vand.u32 %v1199, 4294901760
        %v1201 = vsub.f32 %v1199, %v1200
        %v1202 = vand.u32 %v1201, 4294901760
        %1203 = vmatpush.msra.mxu0 %v1202
        %v1204 = vand.u32 %v326, 4294901760
        %v1205 = vsub.f32 %v326, %v1204
        %v1206 = vand.u32 %v1205, 4294901760
        %v1207 = vsub.f32 %v1205, %v1206
        %v1208 = vand.u32 %v1207, 4294901760
        %1209 = vmatpush.msra.mxu0 %v1208
        %v1210 = vand.u32 %v324, 4294901760
        %v1211 = vsub.f32 %v324, %v1210
        %v1212 = vand.u32 %v1211, 4294901760
        %v1213 = vsub.f32 %v1211, %v1212
        %v1214 = vand.u32 %v1213, 4294901760
        %1215 = vmatpush.msra.mxu0 %v1214
        %v1216 = vand.u32 %v322, 4294901760
        %v1217 = vsub.f32 %v322, %v1216
        %v1218 = vand.u32 %v1217, 4294901760
        %v1219 = vsub.f32 %v1217, %v1218
        %v1220 = vand.u32 %v1219, 4294901760
        %1221 = vmatpush.msra.mxu0 %v1220
        %v1222 = vand.u32 %v320, 4294901760
        %v1223 = vsub.f32 %v320, %v1222
        %v1224 = vand.u32 %v1223, 4294901760
        %v1225 = vsub.f32 %v1223, %v1224
        %v1226 = vand.u32 %v1225, 4294901760
        %1227 = vmatpush.msra.mxu0 %v1226
        %v1228 = vand.u32 %v318, 4294901760
        %v1229 = vsub.f32 %v318, %v1228
        %v1230 = vand.u32 %v1229, 4294901760
        %v1231 = vsub.f32 %v1229, %v1230
        %v1232 = vand.u32 %v1231, 4294901760
        %1233 = vmatpush.msra.mxu0 %v1232
        %v1234 = vand.u32 %v316, 4294901760
        %v1235 = vsub.f32 %v316, %v1234
        %v1236 = vand.u32 %v1235, 4294901760
        %v1237 = vsub.f32 %v1235, %v1236
        %v1238 = vand.u32 %v1237, 4294901760
        %1239 = vmatpush.msra.mxu0 %v1238
        %v1240 = vand.u32 %v314, 4294901760
        %v1241 = vsub.f32 %v314, %v1240
        %v1242 = vand.u32 %v1241, 4294901760
        %v1243 = vsub.f32 %v1241, %v1242
        %v1244 = vand.u32 %v1243, 4294901760
        %1245 = vmatpush.msra.mxu0 %v1244
        %v1246 = vand.u32 %v312, 4294901760
        %v1247 = vsub.f32 %v312, %v1246
        %v1248 = vand.u32 %v1247, 4294901760
        %v1249 = vsub.f32 %v1247, %v1248
        %v1250 = vand.u32 %v1249, 4294901760
        %1251 = vmatpush.msra.mxu0 %v1250
        %v1252 = vand.u32 %v310, 4294901760
        %v1253 = vsub.f32 %v310, %v1252
        %v1254 = vand.u32 %v1253, 4294901760
        %v1255 = vsub.f32 %v1253, %v1254
        %v1256 = vand.u32 %v1255, 4294901760
        %1257 = vmatpush.msra.mxu0 %v1256
        %v1258 = vand.u32 %v308, 4294901760
        %v1259 = vsub.f32 %v308, %v1258
        %v1260 = vand.u32 %v1259, 4294901760
        %v1261 = vsub.f32 %v1259, %v1260
        %v1262 = vand.u32 %v1261, 4294901760
        %1263 = vmatpush.msra.mxu0 %v1262
        %v1264 = vand.u32 %v306, 4294901760
        %v1265 = vsub.f32 %v306, %v1264
        %v1266 = vand.u32 %v1265, 4294901760
        %v1267 = vsub.f32 %v1265, %v1266
        %v1268 = vand.u32 %v1267, 4294901760
        %1269 = vmatpush.msra.mxu0 %v1268
        %v1270 = vand.u32 %v301, 4294901760
        %1271 = vmatmul.f32.gmra.mxu0 %v1270
        %v1272 = vpop.f32.mrf.mxu0
        %v1273 = vadd.f32 %v1164, %v1272
        %v1274 = vand.u32 %v303, 4294901760
        %1275 = vmatmul.f32.gmra.mxu0 %v1274
        %v1276 = vpop.f32.mrf.mxu0
        %v1277 = vadd.f32 %v1172, %v1276
        %1278 = vdwg.mxu0
        %v1279 = vand.u32 %v336, 4294901760
        %v1280 = vsub.f32 %v336, %v1279
        %1281 = vmatpush.msra.mxu0 %v1280
        %v1282 = vand.u32 %v334, 4294901760
        %v1283 = vsub.f32 %v334, %v1282
        %1284 = vmatpush.msra.mxu0 %v1283
        %v1285 = vand.u32 %v332, 4294901760
        %v1286 = vsub.f32 %v332, %v1285
        %1287 = vmatpush.msra.mxu0 %v1286
        %v1288 = vand.u32 %v330, 4294901760
        %v1289 = vsub.f32 %v330, %v1288
        %1290 = vmatpush.msra.mxu0 %v1289
        %v1291 = vand.u32 %v328, 4294901760
        %v1292 = vsub.f32 %v328, %v1291
        %1293 = vmatpush.msra.mxu0 %v1292
        %v1294 = vand.u32 %v326, 4294901760
        %v1295 = vsub.f32 %v326, %v1294
        %1296 = vmatpush.msra.mxu0 %v1295
        %v1297 = vand.u32 %v324, 4294901760
        %v1298 = vsub.f32 %v324, %v1297
        %1299 = vmatpush.msra.mxu0 %v1298
        %v1300 = vand.u32 %v322, 4294901760
        %v1301 = vsub.f32 %v322, %v1300
        %1302 = vmatpush.msra.mxu0 %v1301
        %v1303 = vand.u32 %v320, 4294901760
        %v1304 = vsub.f32 %v320, %v1303
        %1305 = vmatpush.msra.mxu0 %v1304
        %v1306 = vand.u32 %v318, 4294901760
        %v1307 = vsub.f32 %v318, %v1306
        %1308 = vmatpush.msra.mxu0 %v1307
        %v1309 = vand.u32 %v316, 4294901760
        %v1310 = vsub.f32 %v316, %v1309
        %1311 = vmatpush.msra.mxu0 %v1310
        %v1312 = vand.u32 %v314, 4294901760
        %v1313 = vsub.f32 %v314, %v1312
        %1314 = vmatpush.msra.mxu0 %v1313
        %v1315 = vand.u32 %v312, 4294901760
        %v1316 = vsub.f32 %v312, %v1315
        %1317 = vmatpush.msra.mxu0 %v1316
        %v1318 = vand.u32 %v310, 4294901760
        %v1319 = vsub.f32 %v310, %v1318
        %1320 = vmatpush.msra.mxu0 %v1319
        %v1321 = vand.u32 %v308, 4294901760
        %v1322 = vsub.f32 %v308, %v1321
        %1323 = vmatpush.msra.mxu0 %v1322
        %v1324 = vand.u32 %v306, 4294901760
        %v1325 = vsub.f32 %v306, %v1324
        %1326 = vmatpush.msra.mxu0 %v1325
        %v1327 = vand.u32 %v301, 4294901760
        %v1328 = vsub.f32 %v301, %v1327
        %1329 = vmatmul.f32.gmra.mxu0 %v1328
        %v1330 = vpop.f32.mrf.mxu0
        %v1331 = vadd.f32 %v1273, %v1330
        %v1332 = vand.u32 %v303, 4294901760
        %v1333 = vsub.f32 %v303, %v1332
        %1334 = vmatmul.f32.gmra.mxu0 %v1333
        %v1335 = vpop.f32.mrf.mxu0
        %v1336 = vadd.f32 %v1277, %v1335
        %1337 = vdwg.mxu0
        %v1338 = vand.u32 %v336, 4294901760
        %1339 = vmatpush.msra.mxu0 %v1338
        %v1340 = vand.u32 %v334, 4294901760
        %1341 = vmatpush.msra.mxu0 %v1340
        %v1342 = vand.u32 %v332, 4294901760
        %1343 = vmatpush.msra.mxu0 %v1342
        %v1344 = vand.u32 %v330, 4294901760
        %1345 = vmatpush.msra.mxu0 %v1344
        %v1346 = vand.u32 %v328, 4294901760
        %1347 = vmatpush.msra.mxu0 %v1346
        %v1348 = vand.u32 %v326, 4294901760
        %1349 = vmatpush.msra.mxu0 %v1348
        %v1350 = vand.u32 %v324, 4294901760
        %1351 = vmatpush.msra.mxu0 %v1350
        %v1352 = vand.u32 %v322, 4294901760
        %1353 = vmatpush.msra.mxu0 %v1352
        %v1354 = vand.u32 %v320, 4294901760
        %1355 = vmatpush.msra.mxu0 %v1354
        %v1356 = vand.u32 %v318, 4294901760
        %1357 = vmatpush.msra.mxu0 %v1356
        %v1358 = vand.u32 %v316, 4294901760
        %1359 = vmatpush.msra.mxu0 %v1358
        %v1360 = vand.u32 %v314, 4294901760
        %1361 = vmatpush.msra.mxu0 %v1360
        %v1362 = vand.u32 %v312, 4294901760
        %1363 = vmatpush.msra.mxu0 %v1362
        %v1364 = vand.u32 %v310, 4294901760
        %1365 = vmatpush.msra.mxu0 %v1364
        %v1366 = vand.u32 %v308, 4294901760
        %1367 = vmatpush.msra.mxu0 %v1366
        %v1368 = vand.u32 %v306, 4294901760
        %1369 = vmatpush.msra.mxu0 %v1368
        %v1370 = vand.u32 %v301, 4294901760
        %v1371 = vsub.f32 %v301, %v1370
        %v1372 = vand.u32 %v1371, 4294901760
        %1373 = vmatmul.f32.gmra.mxu0 %v1372
        %v1374 = vpop.f32.mrf.mxu0
        %v1375 = vadd.f32 %v1331, %v1374
        %v1376 = vand.u32 %v303, 4294901760
        %v1377 = vsub.f32 %v303, %v1376
        %v1378 = vand.u32 %v1377, 4294901760
        %1379 = vmatmul.f32.gmra.mxu0 %v1378
        %v1380 = vpop.f32.mrf.mxu0
        %v1381 = vadd.f32 %v1336, %v1380
        %1382 = vdwg.mxu0
        %v1383 = vand.u32 %v336, 4294901760
        %v1384 = vsub.f32 %v336, %v1383
        %v1385 = vand.u32 %v1384, 4294901760
        %1386 = vmatpush.msra.mxu0 %v1385
        %v1387 = vand.u32 %v334, 4294901760
        %v1388 = vsub.f32 %v334, %v1387
        %v1389 = vand.u32 %v1388, 4294901760
        %1390 = vmatpush.msra.mxu0 %v1389
        %v1391 = vand.u32 %v332, 4294901760
        %v1392 = vsub.f32 %v332, %v1391
        %v1393 = vand.u32 %v1392, 4294901760
        %1394 = vmatpush.msra.mxu0 %v1393
        %v1395 = vand.u32 %v330, 4294901760
        %v1396 = vsub.f32 %v330, %v1395
        %v1397 = vand.u32 %v1396, 4294901760
        %1398 = vmatpush.msra.mxu0 %v1397
        %v1399 = vand.u32 %v328, 4294901760
        %v1400 = vsub.f32 %v328, %v1399
        %v1401 = vand.u32 %v1400, 4294901760
        %1402 = vmatpush.msra.mxu0 %v1401
        %v1403 = vand.u32 %v326, 4294901760
        %v1404 = vsub.f32 %v326, %v1403
        %v1405 = vand.u32 %v1404, 4294901760
        %1406 = vmatpush.msra.mxu0 %v1405
        %v1407 = vand.u32 %v324, 4294901760
        %v1408 = vsub.f32 %v324, %v1407
        %v1409 = vand.u32 %v1408, 4294901760
        %1410 = vmatpush.msra.mxu0 %v1409
        %v1411 = vand.u32 %v322, 4294901760
        %v1412 = vsub.f32 %v322, %v1411
        %v1413 = vand.u32 %v1412, 4294901760
        %1414 = vmatpush.msra.mxu0 %v1413
        %v1415 = vand.u32 %v320, 4294901760
        %v1416 = vsub.f32 %v320, %v1415
        %v1417 = vand.u32 %v1416, 4294901760
        %1418 = vmatpush.msra.mxu0 %v1417
        %v1419 = vand.u32 %v318, 4294901760
        %v1420 = vsub.f32 %v318, %v1419
        %v1421 = vand.u32 %v1420, 4294901760
        %1422 = vmatpush.msra.mxu0 %v1421
        %v1423 = vand.u32 %v316, 4294901760
        %v1424 = vsub.f32 %v316, %v1423
        %v1425 = vand.u32 %v1424, 4294901760
        %1426 = vmatpush.msra.mxu0 %v1425
        %v1427 = vand.u32 %v314, 4294901760
        %v1428 = vsub.f32 %v314, %v1427
        %v1429 = vand.u32 %v1428, 4294901760
        %1430 = vmatpush.msra.mxu0 %v1429
        %v1431 = vand.u32 %v312, 4294901760
        %v1432 = vsub.f32 %v312, %v1431
        %v1433 = vand.u32 %v1432, 4294901760
        %1434 = vmatpush.msra.mxu0 %v1433
        %v1435 = vand.u32 %v310, 4294901760
        %v1436 = vsub.f32 %v310, %v1435
        %v1437 = vand.u32 %v1436, 4294901760
        %1438 = vmatpush.msra.mxu0 %v1437
        %v1439 = vand.u32 %v308, 4294901760
        %v1440 = vsub.f32 %v308, %v1439
        %v1441 = vand.u32 %v1440, 4294901760
        %1442 = vmatpush.msra.mxu0 %v1441
        %v1443 = vand.u32 %v306, 4294901760
        %v1444 = vsub.f32 %v306, %v1443
        %v1445 = vand.u32 %v1444, 4294901760
        %1446 = vmatpush.msra.mxu0 %v1445
        %v1447 = vand.u32 %v301, 4294901760
        %1448 = vmatmul.f32.gmra.mxu0 %v1447
        %v1449 = vpop.f32.mrf.mxu0
        %v1450 = vadd.f32 %v1375, %v1449
        %v1451 = vand.u32 %v303, 4294901760
        %1452 = vmatmul.f32.gmra.mxu0 %v1451
        %v1453 = vpop.f32.mrf.mxu0
        %v1454 = vadd.f32 %v1381, %v1453
        %1455 = vdwg.mxu0
        %v1456 = vand.u32 %v336, 4294901760
        %1457 = vmatpush.msra.mxu0 %v1456
        %v1458 = vand.u32 %v334, 4294901760
        %1459 = vmatpush.msra.mxu0 %v1458
        %v1460 = vand.u32 %v332, 4294901760
        %1461 = vmatpush.msra.mxu0 %v1460
        %v1462 = vand.u32 %v330, 4294901760
        %1463 = vmatpush.msra.mxu0 %v1462
        %v1464 = vand.u32 %v328, 4294901760
        %1465 = vmatpush.msra.mxu0 %v1464
        %v1466 = vand.u32 %v326, 4294901760
        %1467 = vmatpush.msra.mxu0 %v1466
        %v1468 = vand.u32 %v324, 4294901760
        %1469 = vmatpush.msra.mxu0 %v1468
        %v1470 = vand.u32 %v322, 4294901760
        %1471 = vmatpush.msra.mxu0 %v1470
        %v1472 = vand.u32 %v320, 4294901760
        %1473 = vmatpush.msra.mxu0 %v1472
        %v1474 = vand.u32 %v318, 4294901760
        %1475 = vmatpush.msra.mxu0 %v1474
        %v1476 = vand.u32 %v316, 4294901760
        %1477 = vmatpush.msra.mxu0 %v1476
        %v1478 = vand.u32 %v314, 4294901760
        %1479 = vmatpush.msra.mxu0 %v1478
        %v1480 = vand.u32 %v312, 4294901760
        %1481 = vmatpush.msra.mxu0 %v1480
        %v1482 = vand.u32 %v310, 4294901760
        %1483 = vmatpush.msra.mxu0 %v1482
        %v1484 = vand.u32 %v308, 4294901760
        %1485 = vmatpush.msra.mxu0 %v1484
        %v1486 = vand.u32 %v306, 4294901760
        %1487 = vmatpush.msra.mxu0 %v1486
        %v1488 = vand.u32 %v301, 4294901760
        %1489 = vmatmul.f32.gmra.mxu0 %v1488
        %v1490 = vpop.f32.mrf.mxu0
        %v1491 = vadd.f32 %v1450, %v1490
        %v1492 = vand.u32 %v303, 4294901760
        %1493 = vmatmul.f32.gmra.mxu0 %v1492
        %v1494 = vpop.f32.mrf.mxu0
        %v1495 = vadd.f32 %v1454, %v1494
        %1496 = vdwg.mxu0
        %v1497 = vand.u32 %v368, 4294901760
        %1498 = vmatpush.msra.mxu0 %v1497
        %v1499 = vand.u32 %v366, 4294901760
        %1500 = vmatpush.msra.mxu0 %v1499
        %v1501 = vand.u32 %v364, 4294901760
        %1502 = vmatpush.msra.mxu0 %v1501
        %v1503 = vand.u32 %v362, 4294901760
        %1504 = vmatpush.msra.mxu0 %v1503
        %v1505 = vand.u32 %v360, 4294901760
        %1506 = vmatpush.msra.mxu0 %v1505
        %v1507 = vand.u32 %v358, 4294901760
        %1508 = vmatpush.msra.mxu0 %v1507
        %v1509 = vand.u32 %v356, 4294901760
        %1510 = vmatpush.msra.mxu0 %v1509
        %v1511 = vand.u32 %v354, 4294901760
        %1512 = vmatpush.msra.mxu0 %v1511
        %v1513 = vand.u32 %v352, 4294901760
        %1514 = vmatpush.msra.mxu0 %v1513
        %v1515 = vand.u32 %v350, 4294901760
        %1516 = vmatpush.msra.mxu0 %v1515
        %v1517 = vand.u32 %v348, 4294901760
        %1518 = vmatpush.msra.mxu0 %v1517
        %v1519 = vand.u32 %v346, 4294901760
        %1520 = vmatpush.msra.mxu0 %v1519
        %v1521 = vand.u32 %v344, 4294901760
        %1522 = vmatpush.msra.mxu0 %v1521
        %v1523 = vand.u32 %v342, 4294901760
        %1524 = vmatpush.msra.mxu0 %v1523
        %v1525 = vand.u32 %v340, 4294901760
        %1526 = vmatpush.msra.mxu0 %v1525
        %v1527 = vand.u32 %v338, 4294901760
        %1528 = vmatpush.msra.mxu0 %v1527
        %v1529 = vand.u32 %v302, 4294901760
        %v1530 = vsub.f32 %v302, %v1529
        %v1531 = vand.u32 %v1530, 4294901760
        %v1532 = vsub.f32 %v1530, %v1531
        %v1533 = vand.u32 %v1532, 4294901760
        %1534 = vmatmul.f32.gmra.mxu0 %v1533
        %v1535 = vpop.f32.mrf.mxu0
        %v1536 = vadd.f32 %v1491, %v1535
        %v1537 = vand.u32 %v304, 4294901760
        %v1538 = vsub.f32 %v304, %v1537
        %v1539 = vand.u32 %v1538, 4294901760
        %v1540 = vsub.f32 %v1538, %v1539
        %v1541 = vand.u32 %v1540, 4294901760
        %1542 = vmatmul.f32.gmra.mxu0 %v1541
        %v1543 = vpop.f32.mrf.mxu0
        %v1544 = vadd.f32 %v1495, %v1543
        %1545 = vdwg.mxu0
        %v1546 = vand.u32 %v368, 4294901760
        %v1547 = vsub.f32 %v368, %v1546
        %v1548 = vand.u32 %v1547, 4294901760
        %v1549 = vsub.f32 %v1547, %v1548
        %v1550 = vand.u32 %v1549, 4294901760
        %1551 = vmatpush.msra.mxu0 %v1550
        %v1552 = vand.u32 %v366, 4294901760
        %v1553 = vsub.f32 %v366, %v1552
        %v1554 = vand.u32 %v1553, 4294901760
        %v1555 = vsub.f32 %v1553, %v1554
        %v1556 = vand.u32 %v1555, 4294901760
        %1557 = vmatpush.msra.mxu0 %v1556
        %v1558 = vand.u32 %v364, 4294901760
        %v1559 = vsub.f32 %v364, %v1558
        %v1560 = vand.u32 %v1559, 4294901760
        %v1561 = vsub.f32 %v1559, %v1560
        %v1562 = vand.u32 %v1561, 4294901760
        %1563 = vmatpush.msra.mxu0 %v1562
        %v1564 = vand.u32 %v362, 4294901760
        %v1565 = vsub.f32 %v362, %v1564
        %v1566 = vand.u32 %v1565, 4294901760
        %v1567 = vsub.f32 %v1565, %v1566
        %v1568 = vand.u32 %v1567, 4294901760
        %1569 = vmatpush.msra.mxu0 %v1568
        %v1570 = vand.u32 %v360, 4294901760
        %v1571 = vsub.f32 %v360, %v1570
        %v1572 = vand.u32 %v1571, 4294901760
        %v1573 = vsub.f32 %v1571, %v1572
        %v1574 = vand.u32 %v1573, 4294901760
        %1575 = vmatpush.msra.mxu0 %v1574
        %v1576 = vand.u32 %v358, 4294901760
        %v1577 = vsub.f32 %v358, %v1576
        %v1578 = vand.u32 %v1577, 4294901760
        %v1579 = vsub.f32 %v1577, %v1578
        %v1580 = vand.u32 %v1579, 4294901760
        %1581 = vmatpush.msra.mxu0 %v1580
        %v1582 = vand.u32 %v356, 4294901760
        %v1583 = vsub.f32 %v356, %v1582
        %v1584 = vand.u32 %v1583, 4294901760
        %v1585 = vsub.f32 %v1583, %v1584
        %v1586 = vand.u32 %v1585, 4294901760
        %1587 = vmatpush.msra.mxu0 %v1586
        %v1588 = vand.u32 %v354, 4294901760
        %v1589 = vsub.f32 %v354, %v1588
        %v1590 = vand.u32 %v1589, 4294901760
        %v1591 = vsub.f32 %v1589, %v1590
        %v1592 = vand.u32 %v1591, 4294901760
        %1593 = vmatpush.msra.mxu0 %v1592
        %v1594 = vand.u32 %v352, 4294901760
        %v1595 = vsub.f32 %v352, %v1594
        %v1596 = vand.u32 %v1595, 4294901760
        %v1597 = vsub.f32 %v1595, %v1596
        %v1598 = vand.u32 %v1597, 4294901760
        %1599 = vmatpush.msra.mxu0 %v1598
        %v1600 = vand.u32 %v350, 4294901760
        %v1601 = vsub.f32 %v350, %v1600
        %v1602 = vand.u32 %v1601, 4294901760
        %v1603 = vsub.f32 %v1601, %v1602
        %v1604 = vand.u32 %v1603, 4294901760
        %1605 = vmatpush.msra.mxu0 %v1604
        %v1606 = vand.u32 %v348, 4294901760
        %v1607 = vsub.f32 %v348, %v1606
        %v1608 = vand.u32 %v1607, 4294901760
        %v1609 = vsub.f32 %v1607, %v1608
        %v1610 = vand.u32 %v1609, 4294901760
        %1611 = vmatpush.msra.mxu0 %v1610
        %v1612 = vand.u32 %v346, 4294901760
        %v1613 = vsub.f32 %v346, %v1612
        %v1614 = vand.u32 %v1613, 4294901760
        %v1615 = vsub.f32 %v1613, %v1614
        %v1616 = vand.u32 %v1615, 4294901760
        %1617 = vmatpush.msra.mxu0 %v1616
        %v1618 = vand.u32 %v344, 4294901760
        %v1619 = vsub.f32 %v344, %v1618
        %v1620 = vand.u32 %v1619, 4294901760
        %v1621 = vsub.f32 %v1619, %v1620
        %v1622 = vand.u32 %v1621, 4294901760
        %1623 = vmatpush.msra.mxu0 %v1622
        %v1624 = vand.u32 %v342, 4294901760
        %v1625 = vsub.f32 %v342, %v1624
        %v1626 = vand.u32 %v1625, 4294901760
        %v1627 = vsub.f32 %v1625, %v1626
        %v1628 = vand.u32 %v1627, 4294901760
        %1629 = vmatpush.msra.mxu0 %v1628
        %v1630 = vand.u32 %v340, 4294901760
        %v1631 = vsub.f32 %v340, %v1630
        %v1632 = vand.u32 %v1631, 4294901760
        %v1633 = vsub.f32 %v1631, %v1632
        %v1634 = vand.u32 %v1633, 4294901760
        %1635 = vmatpush.msra.mxu0 %v1634
        %v1636 = vand.u32 %v338, 4294901760
        %v1637 = vsub.f32 %v338, %v1636
        %v1638 = vand.u32 %v1637, 4294901760
        %v1639 = vsub.f32 %v1637, %v1638
        %v1640 = vand.u32 %v1639, 4294901760
        %1641 = vmatpush.msra.mxu0 %v1640
        %v1642 = vand.u32 %v302, 4294901760
        %1643 = vmatmul.f32.gmra.mxu0 %v1642
        %v1644 = vpop.f32.mrf.mxu0
        %v1645 = vadd.f32 %v1536, %v1644
        %v1646 = vand.u32 %v304, 4294901760
        %1647 = vmatmul.f32.gmra.mxu0 %v1646
        %v1648 = vpop.f32.mrf.mxu0
        %v1649 = vadd.f32 %v1544, %v1648
        %1650 = vdwg.mxu0
        %v1651 = vand.u32 %v368, 4294901760
        %v1652 = vsub.f32 %v368, %v1651
        %1653 = vmatpush.msra.mxu0 %v1652
        %v1654 = vand.u32 %v366, 4294901760
        %v1655 = vsub.f32 %v366, %v1654
        %1656 = vmatpush.msra.mxu0 %v1655
        %v1657 = vand.u32 %v364, 4294901760
        %v1658 = vsub.f32 %v364, %v1657
        %1659 = vmatpush.msra.mxu0 %v1658
        %v1660 = vand.u32 %v362, 4294901760
        %v1661 = vsub.f32 %v362, %v1660
        %1662 = vmatpush.msra.mxu0 %v1661
        %v1663 = vand.u32 %v360, 4294901760
        %v1664 = vsub.f32 %v360, %v1663
        %1665 = vmatpush.msra.mxu0 %v1664
        %v1666 = vand.u32 %v358, 4294901760
        %v1667 = vsub.f32 %v358, %v1666
        %1668 = vmatpush.msra.mxu0 %v1667
        %v1669 = vand.u32 %v356, 4294901760
        %v1670 = vsub.f32 %v356, %v1669
        %1671 = vmatpush.msra.mxu0 %v1670
        %v1672 = vand.u32 %v354, 4294901760
        %v1673 = vsub.f32 %v354, %v1672
        %1674 = vmatpush.msra.mxu0 %v1673
        %v1675 = vand.u32 %v352, 4294901760
        %v1676 = vsub.f32 %v352, %v1675
        %1677 = vmatpush.msra.mxu0 %v1676
        %v1678 = vand.u32 %v350, 4294901760
        %v1679 = vsub.f32 %v350, %v1678
        %1680 = vmatpush.msra.mxu0 %v1679
        %v1681 = vand.u32 %v348, 4294901760
        %v1682 = vsub.f32 %v348, %v1681
        %1683 = vmatpush.msra.mxu0 %v1682
        %v1684 = vand.u32 %v346, 4294901760
        %v1685 = vsub.f32 %v346, %v1684
        %1686 = vmatpush.msra.mxu0 %v1685
        %v1687 = vand.u32 %v344, 4294901760
        %v1688 = vsub.f32 %v344, %v1687
        %1689 = vmatpush.msra.mxu0 %v1688
        %v1690 = vand.u32 %v342, 4294901760
        %v1691 = vsub.f32 %v342, %v1690
        %1692 = vmatpush.msra.mxu0 %v1691
        %v1693 = vand.u32 %v340, 4294901760
        %v1694 = vsub.f32 %v340, %v1693
        %1695 = vmatpush.msra.mxu0 %v1694
        %v1696 = vand.u32 %v338, 4294901760
        %v1697 = vsub.f32 %v338, %v1696
        %1698 = vmatpush.msra.mxu0 %v1697
        %v1699 = vand.u32 %v302, 4294901760
        %v1700 = vsub.f32 %v302, %v1699
        %1701 = vmatmul.f32.gmra.mxu0 %v1700
        %v1702 = vpop.f32.mrf.mxu0
        %v1703 = vadd.f32 %v1645, %v1702
        %v1704 = vand.u32 %v304, 4294901760
        %v1705 = vsub.f32 %v304, %v1704
        %1706 = vmatmul.f32.gmra.mxu0 %v1705
        %v1707 = vpop.f32.mrf.mxu0
        %v1708 = vadd.f32 %v1649, %v1707
        %1709 = vdwg.mxu0
        %v1710 = vand.u32 %v368, 4294901760
        %1711 = vmatpush.msra.mxu0 %v1710
        %v1712 = vand.u32 %v366, 4294901760
        %1713 = vmatpush.msra.mxu0 %v1712
        %v1714 = vand.u32 %v364, 4294901760
        %1715 = vmatpush.msra.mxu0 %v1714
        %v1716 = vand.u32 %v362, 4294901760
        %1717 = vmatpush.msra.mxu0 %v1716
        %v1718 = vand.u32 %v360, 4294901760
        %1719 = vmatpush.msra.mxu0 %v1718
        %v1720 = vand.u32 %v358, 4294901760
        %1721 = vmatpush.msra.mxu0 %v1720
        %v1722 = vand.u32 %v356, 4294901760
        %1723 = vmatpush.msra.mxu0 %v1722
        %v1724 = vand.u32 %v354, 4294901760
        %1725 = vmatpush.msra.mxu0 %v1724
        %v1726 = vand.u32 %v352, 4294901760
        %1727 = vmatpush.msra.mxu0 %v1726
        %v1728 = vand.u32 %v350, 4294901760
        %1729 = vmatpush.msra.mxu0 %v1728
        %v1730 = vand.u32 %v348, 4294901760
        %1731 = vmatpush.msra.mxu0 %v1730
        %v1732 = vand.u32 %v346, 4294901760
        %1733 = vmatpush.msra.mxu0 %v1732
        %v1734 = vand.u32 %v344, 4294901760
        %1735 = vmatpush.msra.mxu0 %v1734
        %v1736 = vand.u32 %v342, 4294901760
        %1737 = vmatpush.msra.mxu0 %v1736
        %v1738 = vand.u32 %v340, 4294901760
        %1739 = vmatpush.msra.mxu0 %v1738
        %v1740 = vand.u32 %v338, 4294901760
        %1741 = vmatpush.msra.mxu0 %v1740
        %v1742 = vand.u32 %v302, 4294901760
        %v1743 = vsub.f32 %v302, %v1742
        %v1744 = vand.u32 %v1743, 4294901760
        %1745 = vmatmul.f32.gmra.mxu0 %v1744
        %v1746 = vpop.f32.mrf.mxu0
        %v1747 = vadd.f32 %v1703, %v1746
        %v1748 = vand.u32 %v304, 4294901760
        %v1749 = vsub.f32 %v304, %v1748
        %v1750 = vand.u32 %v1749, 4294901760
        %1751 = vmatmul.f32.gmra.mxu0 %v1750
        %v1752 = vpop.f32.mrf.mxu0
        %v1753 = vadd.f32 %v1708, %v1752
        %1754 = vdwg.mxu0
        %v1755 = vand.u32 %v368, 4294901760
        %v1756 = vsub.f32 %v368, %v1755
        %v1757 = vand.u32 %v1756, 4294901760
        %1758 = vmatpush.msra.mxu0 %v1757
        %v1759 = vand.u32 %v366, 4294901760
        %v1760 = vsub.f32 %v366, %v1759
        %v1761 = vand.u32 %v1760, 4294901760
        %1762 = vmatpush.msra.mxu0 %v1761
        %v1763 = vand.u32 %v364, 4294901760
        %v1764 = vsub.f32 %v364, %v1763
        %v1765 = vand.u32 %v1764, 4294901760
        %1766 = vmatpush.msra.mxu0 %v1765
        %v1767 = vand.u32 %v362, 4294901760
        %v1768 = vsub.f32 %v362, %v1767
        %v1769 = vand.u32 %v1768, 4294901760
        %1770 = vmatpush.msra.mxu0 %v1769
        %v1771 = vand.u32 %v360, 4294901760
        %v1772 = vsub.f32 %v360, %v1771
        %v1773 = vand.u32 %v1772, 4294901760
        %1774 = vmatpush.msra.mxu0 %v1773
        %v1775 = vand.u32 %v358, 4294901760
        %v1776 = vsub.f32 %v358, %v1775
        %v1777 = vand.u32 %v1776, 4294901760
        %1778 = vmatpush.msra.mxu0 %v1777
        %v1779 = vand.u32 %v356, 4294901760
        %v1780 = vsub.f32 %v356, %v1779
        %v1781 = vand.u32 %v1780, 4294901760
        %1782 = vmatpush.msra.mxu0 %v1781
        %v1783 = vand.u32 %v354, 4294901760
        %v1784 = vsub.f32 %v354, %v1783
        %v1785 = vand.u32 %v1784, 4294901760
        %1786 = vmatpush.msra.mxu0 %v1785
        %v1787 = vand.u32 %v352, 4294901760
        %v1788 = vsub.f32 %v352, %v1787
        %v1789 = vand.u32 %v1788, 4294901760
        %1790 = vmatpush.msra.mxu0 %v1789
        %v1791 = vand.u32 %v350, 4294901760
        %v1792 = vsub.f32 %v350, %v1791
        %v1793 = vand.u32 %v1792, 4294901760
        %1794 = vmatpush.msra.mxu0 %v1793
        %v1795 = vand.u32 %v348, 4294901760
        %v1796 = vsub.f32 %v348, %v1795
        %v1797 = vand.u32 %v1796, 4294901760
        %1798 = vmatpush.msra.mxu0 %v1797
        %v1799 = vand.u32 %v346, 4294901760
        %v1800 = vsub.f32 %v346, %v1799
        %v1801 = vand.u32 %v1800, 4294901760
        %1802 = vmatpush.msra.mxu0 %v1801
        %v1803 = vand.u32 %v344, 4294901760
        %v1804 = vsub.f32 %v344, %v1803
        %v1805 = vand.u32 %v1804, 4294901760
        %1806 = vmatpush.msra.mxu0 %v1805
        %v1807 = vand.u32 %v342, 4294901760
        %v1808 = vsub.f32 %v342, %v1807
        %v1809 = vand.u32 %v1808, 4294901760
        %1810 = vmatpush.msra.mxu0 %v1809
        %v1811 = vand.u32 %v340, 4294901760
        %v1812 = vsub.f32 %v340, %v1811
        %v1813 = vand.u32 %v1812, 4294901760
        %1814 = vmatpush.msra.mxu0 %v1813
        %v1815 = vand.u32 %v338, 4294901760
        %v1816 = vsub.f32 %v338, %v1815
        %v1817 = vand.u32 %v1816, 4294901760
        %1818 = vmatpush.msra.mxu0 %v1817
        %v1819 = vand.u32 %v302, 4294901760
        %1820 = vmatmul.f32.gmra.mxu0 %v1819
        %v1821 = vpop.f32.mrf.mxu0
        %v1822 = vadd.f32 %v1747, %v1821
        %v1823 = vand.u32 %v304, 4294901760
        %1824 = vmatmul.f32.gmra.mxu0 %v1823
        %v1825 = vpop.f32.mrf.mxu0
        %v1826 = vadd.f32 %v1753, %v1825
        %1827 = vdwg.mxu0
        %v1828 = vand.u32 %v368, 4294901760
        %1829 = vmatpush.msra.mxu0 %v1828
        %v1830 = vand.u32 %v366, 4294901760
        %1831 = vmatpush.msra.mxu0 %v1830
        %v1832 = vand.u32 %v364, 4294901760
        %1833 = vmatpush.msra.mxu0 %v1832
        %v1834 = vand.u32 %v362, 4294901760
        %1835 = vmatpush.msra.mxu0 %v1834
        %v1836 = vand.u32 %v360, 4294901760
        %1837 = vmatpush.msra.mxu0 %v1836
        %v1838 = vand.u32 %v358, 4294901760
        %1839 = vmatpush.msra.mxu0 %v1838
        %v1840 = vand.u32 %v356, 4294901760
        %1841 = vmatpush.msra.mxu0 %v1840
        %v1842 = vand.u32 %v354, 4294901760
        %1843 = vmatpush.msra.mxu0 %v1842
        %v1844 = vand.u32 %v352, 4294901760
        %1845 = vmatpush.msra.mxu0 %v1844
        %v1846 = vand.u32 %v350, 4294901760
        %1847 = vmatpush.msra.mxu0 %v1846
        %v1848 = vand.u32 %v348, 4294901760
        %1849 = vmatpush.msra.mxu0 %v1848
        %v1850 = vand.u32 %v346, 4294901760
        %1851 = vmatpush.msra.mxu0 %v1850
        %v1852 = vand.u32 %v344, 4294901760
        %1853 = vmatpush.msra.mxu0 %v1852
        %v1854 = vand.u32 %v342, 4294901760
        %1855 = vmatpush.msra.mxu0 %v1854
        %v1856 = vand.u32 %v340, 4294901760
        %1857 = vmatpush.msra.mxu0 %v1856
        %v1858 = vand.u32 %v338, 4294901760
        %1859 = vmatpush.msra.mxu0 %v1858
        %v1860 = vand.u32 %v302, 4294901760
        %1861 = vmatmul.f32.gmra.mxu0 %v1860
        %v1862 = vpop.f32.mrf.mxu0
        %v1863 = vadd.f32 %v1822, %v1862
        %v1864 = vand.u32 %v304, 4294901760
        %1865 = vmatmul.f32.gmra.mxu0 %v1864
        %v1866 = vpop.f32.mrf.mxu0
        %v1867 = vadd.f32 %v1826, %v1866
        %1868 = vdwg.mxu0
        %v1869 = vtanh.pop %v1119
        %v1870 = vtanh.pop %v1863
        %v1871 = vtanh.pop %v1123
        %v1872 = vtanh.pop %v1867
        %v1873 = vld [vmem:[%s262] sm:$0xff]
        %v1874 = vld [vmem:[%s262 + $0x8] sm:$0xff]
        %v1875 = vld [vmem:[%s262 + $0x10] sm:$0xff]
        %v1876 = vld [vmem:[%s262 + $0x18] sm:$0xff]
        %v1877 = vsub.f32 %v1873, %v1869
        %v1878 = vsub.f32 %v1874, %v1870
        %v1879 = vsub.f32 %v1875, %v1871
        %v1880 = vsub.f32 %v1876, %v1872
        %1881 = vst [vmem:[%s297] sm:$0xff] %v1877
        %1882 = vst [vmem:[%s297 + $0x8] sm:$0xff] %v1878
        %1883 = vst [vmem:[%s297 + $0x10] sm:$0xff] %v1879
        %1884 = vst [vmem:[%s297 + $0x18] sm:$0xff] %v1880
        %s1885 = sand.u32 %s144, 1
        %s1886 = scalar_lea.sflag [#allocation4], %s1885
        %s1887 = sand.u32 %s144, 1
        %s1888 = smul.addr %s1887, 32
        %s1889 = scalar_lea.vmem [#allocation8], %s1888
        // Predicated region
        $region49: #{tpu_custom_call.1} parent=35 // pred_check
          %p1890 = pneg %p154
        $region50: #{tpu_custom_call.1} parent=35 // pred_check_branch
          %1892 = sbr.rel (%p1890) target = $region52
        $region51: #{tpu_custom_call.1} parent=35 // pred_region
          %s1893 = smul.u32 2, %s29
          %1895 = vsyncadd %s1886, 0
          %s1896 = smul.addr %s28, 4
          %s1897 = sadd.s32 %s1893, %s1896
          %s1898 = smul.addr %s1897, 8
          %s1899 = scalar_lea.hbm %s4, %s1898
          %s1900 = sshll.u32 %s1889, 4
          %s1901 = int_to_ptr.vmem [resolvable:$true] %s1900
          %s1902 = sshll.u32 %s1899, 4
          %s1903 = int_to_ptr.hbm [resolvable:$true] %s1902
          %1908 = dma.vmem_to_hbm [thread:$0]  %s1901, 512, %s1903, %s1886, 256, 256, 16
        $region52: #{tpu_custom_call.1} parent=35 // pred_fallthru
          _
      $region36: #{tpu_custom_call.1} parent=5 // pred_fallthru
        _
      %p1909 = scmp.le.s32.totalorder 2, %s19
      // Predicated region
      $region53: #{tpu_custom_call.1} parent=5 // pred_check
        %p1910 = pneg %p1909
      $region54: #{tpu_custom_call.1} parent=5 // pred_check_branch
        %1912 = sbr.rel (%p1910) target = $region56
      $region55: #{tpu_custom_call.1} parent=5 // pred_region
        %s1913 = ssub.s32 %s19, 2
        // Predicated region
        $region57: #{tpu_custom_call.1} parent=55 // pred_check
          %p1914 = pneg %p160
        $region58: #{tpu_custom_call.1} parent=55 // pred_check_branch
          %1916 = sbr.rel (%p1914) target = $region60
        $region59: #{tpu_custom_call.1} parent=55 // pred_region
          %s1917 = sand.u32 %s145, 1
          %s1918 = scalar_lea.sflag [#allocation4], %s1917
          %s1919 = sand.u32 %s145, 1
          %s1920 = smul.addr %s1919, 32
          %s1921 = scalar_lea.vmem [#allocation8], %s1920
          %1923 = dma.done %s1918, 512
        $region60: #{tpu_custom_call.1} parent=55 // pred_fallthru
          _
      $region56: #{tpu_custom_call.1} parent=5 // pred_fallthru
        _
    $region6: #{tpu_custom_call.1} parent=1 // loop_footer
      %s23 = sadd.s32 1, %s19
    $region7: #{tpu_custom_call.1} parent=1 // loop_footer_branch
      %18 = sbr.rel target = $region3
    $region8: #{tpu_custom_call.1} parent=1 // loop_exit
      _
    %1924 = vsyncpa [#allocation3], 1
    %s1925 = scalar_lea.sflag [#allocation3], 1
    %1926 = vsyncpa %s1925, 1
    %1927 = vsyncpa [#allocation6], 1
    %s1928 = scalar_lea.sflag [#allocation6], 1
    %1929 = vsyncpa %s1928, 1
    %1930 = vsyncpa [#allocation4], 1
    %s1931 = scalar_lea.sflag [#allocation4], 1
    %1932 = vsyncpa %s1931, 1

</llo_original>
